<compile_context>
chip_gen: v7x
topology: tpu7x:2x2x1
jax: 0.10.0
libtpu: 0.0.40
codegen_flags: <defaults>
</compile_context>

<pallas_src>
import functools

import jax
import jax.numpy as jnp
from jax import lax
from jax.experimental import pallas as pl
from jax.experimental.pallas import tpu as pltpu


def _round_up(x, m):
    return (x + m - 1) // m * m


# ----------------------------------------------------------------------------
# Pallas kernels
# ----------------------------------------------------------------------------
def _gemm_bias_act_kernel(p_ref, w_ref, b_ref, o_ref, acc_ref, *, activation):
    """M/K-tiled GEMM with f32 VMEM accumulator.

    Epilogue (bias + LeakyReLU or Sigmoid) applied on the last K step; the
    result is cast to the output dtype (bf16 for hidden layers).
    """
    k = pl.program_id(1)

    @pl.when(k == 0)
    def _():
        acc_ref[...] = jnp.zeros_like(acc_ref)

    acc_ref[...] += jnp.dot(p_ref[...], w_ref[...],
                            preferred_element_type=jnp.float32)

    @pl.when(k == pl.num_programs(1) - 1)
    def _():
        y = acc_ref[...] + b_ref[...]               # bias, broadcast [1, C_pad]
        if activation == "lrelu":
            y = jnp.where(y > 0, y, 0.2 * y)        # LeakyReLU(0.2)
        elif activation == "sigmoid":
            y = jax.nn.sigmoid(y)
        o_ref[...] = y.astype(o_ref.dtype)


def _gemm_bias_stats_kernel(p_ref, w_ref, b_ref, o_ref, sum_ref, sq_ref, acc_ref):
    """GEMM that writes pre-BN activations (conv + bias, f32) and per-M-tile
    channel sum / sum-of-squares blocks.

    sum_ref / sq_ref are (8, C_pad) blocks indexed by the M grid axis (so the M
    axis remains "parallel"); all 8 sublane rows carry the same per-tile total
    (broadcast write avoids masked sub-row stores) -- the wrapper reads row 0
    of each tile and reduces over tiles.
    """
    k = pl.program_id(1)

    @pl.when(k == 0)
    def _():
        acc_ref[...] = jnp.zeros_like(acc_ref)

    acc_ref[...] += jnp.dot(p_ref[...], w_ref[...],
                            preferred_element_type=jnp.float32)

    @pl.when(k == pl.num_programs(1) - 1)
    def _():
        y = acc_ref[...] + b_ref[...]
        o_ref[...] = y
        s = jnp.sum(y, axis=0, keepdims=True)
        q = jnp.sum(y * y, axis=0, keepdims=True)
        sum_ref[...] = jnp.broadcast_to(s, sum_ref.shape)
        sq_ref[...] = jnp.broadcast_to(q, sq_ref.shape)


def _affine_lrelu_kernel(y_ref, scale_ref, shift_ref, o_ref):
    """Second BN pass: y * scale + shift, then LeakyReLU(0.2). Tiled over M."""
    z = y_ref[...] * scale_ref[...] + shift_ref[...]
    o_ref[...] = jnp.where(z > 0, z, 0.2 * z).astype(o_ref.dtype)


# ----------------------------------------------------------------------------
# im2col glue (NHWC, lightweight: no 6-D transpose, channel-minor K ordering)
# ----------------------------------------------------------------------------
def _im2col_nhwc(x, KH, KW, stride, pad):
    N, H, W, C = x.shape
    OH = (H + 2 * pad - KH) // stride + 1
    OW = (W + 2 * pad - KW) // stride + 1
    xp = jnp.pad(x, ((0, 0), (pad, pad), (pad, pad), (0, 0)))
    cols = []
    for kh in range(KH):
        for kw in range(KW):
            cols.append(xp[:, kh:kh + stride * OH:stride,
                               kw:kw + stride * OW:stride, :])
    p = jnp.stack(cols, axis=3)                     # [N, OH, OW, KH*KW, C]
    return p.reshape(N * OH * OW, KH * KW * C), OH, OW


# ----------------------------------------------------------------------------
# One Conv2d(+BatchNorm)(+LeakyReLU/Sigmoid) layer on NHWC activations
# ----------------------------------------------------------------------------
def conv_layer(x, w, b, *, stride, pad, mode, gamma=None, beta=None,
               tm_target=512):
    # x: [N, H, W, Cin] (NHWC, f32 or bf16)  w: [Cout, Cin, KH, KW]  b: [Cout]
    N = x.shape[0]
    Cout, Cin, KH, KW = w.shape
    patches, OH, OW = _im2col_nhwc(x.astype(jnp.bfloat16), KH, KW, stride, pad)
    M, K = patches.shape

    # Tile / pad sizes: lane-dense output (Cout padded to 128), K padded to a
    # multiple of 128, tk | K_pad (256/512-aligned when possible), tm | M_pad.
    C_pad = _round_up(Cout, 128)
    K_pad = _round_up(K, 128)
    tk = 512 if K_pad % 512 == 0 else (256 if K_pad % 256 == 0 else 128)
    tm = min(tm_target, _round_up(M, 8))
    M_pad = _round_up(M, tm)
    nm, nk = M_pad // tm, K_pad // tk

    # bf16 MXU operands; accumulation and epilogue stay in f32.
    p = jnp.pad(patches, ((0, M_pad - M), (0, K_pad - K)))
    wk = jnp.transpose(w, (2, 3, 1, 0)).reshape(K, Cout)      # (kh,kw,ci) x Cout
    wk = jnp.pad(wk, ((0, K_pad - K), (0, C_pad - Cout))).astype(jnp.bfloat16)
    b2 = jnp.pad(b.astype(jnp.float32), (0, C_pad - Cout)).reshape(1, C_pad)

    gemm_in_specs = [
        pl.BlockSpec((tm, tk), lambda mi, k: (mi, k)),        # patches tile
        pl.BlockSpec((tk, C_pad), lambda mi, k: (k, 0)),      # weight tile
        pl.BlockSpec((1, C_pad), lambda mi, k: (0, 0)),       # bias (constant block)
    ]
    y_spec = pl.BlockSpec((tm, C_pad), lambda mi, k: (mi, 0))
    acc_scratch = pltpu.VMEM((tm, C_pad), jnp.float32)

    if mode == "bn_lrelu":
        # Per-M-tile stats blocks -> M axis stays "parallel" (megacore).
        stat_spec = pl.BlockSpec((8, C_pad), lambda mi, k: (mi, 0))
        y, sums, sqs = pl.pallas_call(
            _gemm_bias_stats_kernel,
            out_shape=(jax.ShapeDtypeStruct((M_pad, C_pad), jnp.float32),
                       jax.ShapeDtypeStruct((nm * 8, C_pad), jnp.float32),
                       jax.ShapeDtypeStruct((nm * 8, C_pad), jnp.float32)),
            grid_spec=pltpu.PrefetchScalarGridSpec(
                num_scalar_prefetch=0, grid=(nm, nk),
                in_specs=gemm_in_specs,
                out_specs=(y_spec, stat_spec, stat_spec),
                scratch_shapes=[acc_scratch]),
            compiler_params=pltpu.CompilerParams(
                dimension_semantics=("parallel", "arbitrary")),
        )(p, wk, b2)

        # Batch statistics over the true M rows. The M_pad - M zero-padded patch
        # rows produce exactly `bias`, so their contribution is removed exactly.
        pad_rows = jnp.float32(M_pad - M)
        bias = b2[0]
        ch_sum = sums.reshape(nm, 8, C_pad)[:, 0, :].sum(axis=0) - pad_rows * bias
        ch_sq = sqs.reshape(nm, 8, C_pad)[:, 0, :].sum(axis=0) - pad_rows * bias * bias
        mean = ch_sum / M
        var = ch_sq / M - mean * mean          # biased variance (PyTorch training BN)
        g = jnp.pad(gamma.astype(jnp.float32), (0, C_pad - Cout))
        bt = jnp.pad(beta.astype(jnp.float32), (0, C_pad - Cout))
        scale = g * lax.rsqrt(var + 1e-5)
        shift = bt - mean * scale

        y = pl.pallas_call(
            _affine_lrelu_kernel,
            out_shape=jax.ShapeDtypeStruct((M_pad, C_pad), jnp.bfloat16),
            grid=(nm,),
            in_specs=[pl.BlockSpec((tm, C_pad), lambda mi: (mi, 0)),
                      pl.BlockSpec((1, C_pad), lambda mi: (0, 0)),
                      pl.BlockSpec((1, C_pad), lambda mi: (0, 0))],
            out_specs=pl.BlockSpec((tm, C_pad), lambda mi: (mi, 0)),
            compiler_params=pltpu.CompilerParams(
                dimension_semantics=("parallel",)),
        )(y, scale.reshape(1, C_pad), shift.reshape(1, C_pad))
    else:
        out_dtype = jnp.float32 if mode == "sigmoid" else jnp.bfloat16
        y = pl.pallas_call(
            functools.partial(_gemm_bias_act_kernel, activation=mode),
            out_shape=jax.ShapeDtypeStruct((M_pad, C_pad), out_dtype),
            grid_spec=pltpu.PrefetchScalarGridSpec(
                num_scalar_prefetch=0, grid=(nm, nk),
                in_specs=gemm_in_specs,
                out_specs=y_spec,
                scratch_shapes=[acc_scratch]),
            compiler_params=pltpu.CompilerParams(
                dimension_semantics=("parallel", "arbitrary")),
        )(p, wk, b2)

    # [M_pad, C_pad] -> [N, OH, OW, Cout]  (NHWC, no transpose needed)
    return y[:M, :Cout].reshape(N, OH, OW, Cout)


# ----------------------------------------------------------------------------
# Discriminator parameters (deterministic, PyTorch-default-style init)
# ----------------------------------------------------------------------------
def init_params(key, d=16):
    layer_dims = [(d, 1), (2 * d, d), (4 * d, 2 * d), (8 * d, 4 * d), (1, 8 * d)]
    params = {}
    keys = jax.random.split(key, 2 * len(layer_dims))
    for i, (cout, cin) in enumerate(layer_dims, start=1):
        fan_in = cin * 4 * 4
        bound = 1.0 / (fan_in ** 0.5)
        params[f"w{i}"] = jax.random.uniform(keys[2 * (i - 1)], (cout, cin, 4, 4),
                                             jnp.float32, -bound, bound)
        params[f"b{i}"] = jax.random.uniform(keys[2 * (i - 1) + 1], (cout,),
                                             jnp.float32, -bound, bound)
    # BatchNorm2d defaults: gamma = 1, beta = 0
    for i, c in zip((2, 3, 4), (2 * d, 4 * d, 8 * d)):
        params[f"g{i}"] = jnp.ones((c,), jnp.float32)
        params[f"bt{i}"] = jnp.zeros((c,), jnp.float32)
    return params


def discriminator_forward(x_nchw, p):
    x = jnp.transpose(x_nchw, (0, 2, 3, 1))                  # NHWC end-to-end
    out = conv_layer(x, p["w1"], p["b1"], stride=2, pad=1, mode="lrelu")
    out = conv_layer(out, p["w2"], p["b2"], stride=2, pad=1, mode="bn_lrelu",
                     gamma=p["g2"], beta=p["bt2"])
    out = conv_layer(out, p["w3"], p["b3"], stride=2, pad=1, mode="bn_lrelu",
                     gamma=p["g3"], beta=p["bt3"])
    out = conv_layer(out, p["w4"], p["b4"], stride=2, pad=1, mode="bn_lrelu",
                     gamma=p["g4"], beta=p["bt4"])
    out = conv_layer(out, p["w5"], p["b5"], stride=1, pad=0, mode="sigmoid")
    return jnp.transpose(out, (0, 3, 1, 2))                  # back to NCHW (N,1,1,1)


# ----------------------------------------------------------------------------
# Pure-JAX reference (for correctness check)
# ----------------------------------------------------------------------------
def reference_forward(x, p):
    def conv(x, w, b, stride, pad):
        y = lax.conv_general_dilated(
            x, w, (stride, stride), [(pad, pad), (pad, pad)],
            dimension_numbers=("NCHW", "OIHW", "NCHW"),
            precision=lax.Precision.HIGHEST)
        return y + b.reshape(1, -1, 1, 1)

    def bn(y, g, bt):
        mean = y.mean(axis=(0, 2, 3), keepdims=True)
        var = jnp.square(y - mean).mean(axis=(0, 2, 3), keepdims=True)
        return (y - mean) * lax.rsqrt(var + 1e-5) * g.reshape(1, -1, 1, 1) \
               + bt.reshape(1, -1, 1, 1)

    def lrelu(y):
        return jnp.where(y > 0, y, 0.2 * y)

    out = lrelu(conv(x, p["w1"], p["b1"], 2, 1))
    out = lrelu(bn(conv(out, p["w2"], p["b2"], 2, 1), p["g2"], p["bt2"]))
    out = lrelu(bn(conv(out, p["w3"], p["b3"], 2, 1), p["g3"], p["bt3"]))
    out = lrelu(bn(conv(out, p["w4"], p["b4"], 2, 1), p["g4"], p["bt4"]))
    out = jax.nn.sigmoid(conv(out, p["w5"], p["b5"], 1, 0))
    return out


if __name__ == "__main__":
    key = jax.random.PRNGKey(0)
    k_param, k_x = jax.random.split(key)

    d = 16                      # small d (PyTorch default is 128); same topology
    batch = 2
    x = jax.random.normal(k_x, (batch, 1, 64, 64), jnp.float32)   # NCHW

    params = init_params(k_param, d=d)

    out = discriminator_forward(x, params)
    out = jax.block_until_ready(out)

    ref = jax.block_until_ready(reference_forward(x, params))

    assert out.shape == (batch, 1, 1, 1), out.shape
    assert bool(jnp.all(jnp.isfinite(out)))
    assert bool(jnp.all((out > 0.0) & (out < 1.0)))
    # bf16 MXU operands / bf16 inter-layer activations (f32 accumulation) vs an
    # f32 HIGHEST-precision reference stacked over 5 layers -> relaxed tolerance.
    assert bool(jnp.allclose(out, ref, atol=2e-2, rtol=2e-2)), (out, ref)

    print("KERNEL_OK")
</pallas_src>

<mosaic_0001>
module attributes {stable_mosaic.version = 11 : i64} {
  func.func @_gemm_bias_act_kernel(%arg0: i32, %arg1: i32, %arg2: memref<512x128xbf16, #tpu.memory_space<vmem>>, %arg3: memref<128x128xbf16, #tpu.memory_space<vmem>>, %arg4: memref<1x128xf32, #tpu.memory_space<vmem>>, %arg5: memref<512x128xbf16, #tpu.memory_space<vmem>>, %arg6: memref<512x128xf32, #tpu.memory_space<vmem>>) attributes {dimension_semantics = [#tpu.dimension_semantics<parallel>, #tpu.dimension_semantics<arbitrary>], iteration_bounds = array<i64: 4, 1>, scalar_prefetch = 0 : i64, scratch_operands = 1 : i64, tpu.core_type = #tpu.core_type<tc>, window_params = [{transform_indices = @transform_0, window_bounds = array<i64: 512, 128>}, {transform_indices = @transform_1, window_bounds = array<i64: 128, 128>}, {pipeline_mode = #tpu.pipeline_mode<synchronous>, transform_indices = @transform_2, window_bounds = array<i64: 1, 128>}, {transform_indices = @transform_3, window_bounds = array<i64: 512, 128>}]} {
    %c0_i32 = arith.constant 0 : i32
    %0 = arith.cmpi eq, %arg1, %c0_i32 : i32
    %1 = arith.extui %0 : i1 to i32
    %c0_i32_0 = arith.constant 0 : i32
    %2 = arith.cmpi ne, %1, %c0_i32_0 : i32
    scf.if %2 {
      %cst_10 = arith.constant 0.000000e+00 : f32
      %12 = vector.broadcast %cst_10 : f32 to vector<512x128xf32>
      %c0_11 = arith.constant 0 : index
      %c0_12 = arith.constant 0 : index
      %13 = vector.load %arg6[%c0_11, %c0_12] : memref<512x128xf32, #tpu.memory_space<vmem>>, vector<512x128xf32>
      tpu.vector_store %arg6[%c0_11, %c0_12], %12 {strides = array<i32>} : memref<512x128xf32, #tpu.memory_space<vmem>>, vector<512x128xf32>,
    } else {
    }
    %c0 = arith.constant 0 : index
    %c0_1 = arith.constant 0 : index
    %3 = vector.load %arg6[%c0, %c0_1] : memref<512x128xf32, #tpu.memory_space<vmem>>, vector<512x128xf32>
    %c0_2 = arith.constant 0 : index
    %c0_3 = arith.constant 0 : index
    %4 = vector.load %arg2[%c0_2, %c0_3] : memref<512x128xbf16, #tpu.memory_space<vmem>>, vector<512x128xbf16>
    %c0_4 = arith.constant 0 : index
    %c0_5 = arith.constant 0 : index
    %5 = vector.load %arg3[%c0_4, %c0_5] : memref<128x128xbf16, #tpu.memory_space<vmem>>, vector<128x128xbf16>
    %cst = arith.constant dense<0.000000e+00> : vector<512x128xf32>
    %6 = tpu.matmul %4, %5, %cst {dimension_numbers = #tpu.dot_dimension_numbers<[1], [0], [0], [1], [0, 0, 1, 1], [], []>} : vector<512x128xbf16>, vector<128x128xbf16>, vector<512x128xf32> -> vector<512x128xf32>
    %7 = arith.addf %3, %6 : vector<512x128xf32>
    %c0_6 = arith.constant 0 : index
    %c0_7 = arith.constant 0 : index
    %8 = vector.load %arg6[%c0_6, %c0_7] : memref<512x128xf32, #tpu.memory_space<vmem>>, vector<512x128xf32>
    tpu.vector_store %arg6[%c0_6, %c0_7], %7 {strides = array<i32>} : memref<512x128xf32, #tpu.memory_space<vmem>>, vector<512x128xf32>,
    %c0_i32_8 = arith.constant 0 : i32
    %9 = arith.cmpi eq, %arg1, %c0_i32_8 : i32
    %10 = arith.extui %9 : i1 to i32
    %c0_i32_9 = arith.constant 0 : i32
    %11 = arith.cmpi ne, %10, %c0_i32_9 : i32
    scf.if %11 {
      %c0_10 = arith.constant 0 : index
      %c0_11 = arith.constant 0 : index
      %12 = vector.load %arg6[%c0_10, %c0_11] : memref<512x128xf32, #tpu.memory_space<vmem>>, vector<512x128xf32>
      %c0_12 = arith.constant 0 : index
      %c0_13 = arith.constant 0 : index
      %13 = vector.load %arg4[%c0_12, %c0_13] : memref<1x128xf32, #tpu.memory_space<vmem>>, vector<1x128xf32>
      %14 = vector.broadcast %13 : vector<1x128xf32> to vector<512x128xf32>
      %15 = arith.addf %12, %14 : vector<512x128xf32>
      %cst_14 = arith.constant 0.000000e+00 : f32
      %16 = vector.broadcast %cst_14 : f32 to vector<512x128xf32>
      %17 = arith.cmpf ogt, %15, %16 : vector<512x128xf32>
      %cst_15 = arith.constant 2.000000e-01 : f32
      %18 = vector.broadcast %cst_15 : f32 to vector<512x128xf32>
      %19 = arith.mulf %18, %15 : vector<512x128xf32>
      %20 = arith.select %17, %15, %19 : vector<512x128xi1>, vector<512x128xf32>
      %21 = arith.truncf %20 : vector<512x128xf32> to vector<512x128xbf16>
      %c0_16 = arith.constant 0 : index
      %c0_17 = arith.constant 0 : index
      %22 = vector.load %arg5[%c0_16, %c0_17] : memref<512x128xbf16, #tpu.memory_space<vmem>>, vector<512x128xbf16>
      tpu.vector_store %arg5[%c0_16, %c0_17], %21 {strides = array<i32>} : memref<512x128xbf16, #tpu.memory_space<vmem>>, vector<512x128xbf16>,
    } else {
    }
    return
  }
  func.func @transform_0(%arg0: i32, %arg1: i32) -> (i32, i32) {
    %c0_i32 = arith.constant 0 : i32
    return %arg0, %arg1 : i32, i32
  }
  func.func @transform_1(%arg0: i32, %arg1: i32) -> (i32, i32) {
    %c0_i32 = arith.constant 0 : i32
    %c0_i32_0 = arith.constant 0 : i32
    return %arg1, %c0_i32 : i32, i32
  }
  func.func @transform_2(%arg0: i32, %arg1: i32) -> (i32, i32) {
    %c0_i32 = arith.constant 0 : i32
    %c0_i32_0 = arith.constant 0 : i32
    %c0_i32_1 = arith.constant 0 : i32
    return %c0_i32, %c0_i32_0 : i32, i32
  }
  func.func @transform_3(%arg0: i32, %arg1: i32) -> (i32, i32) {
    %c0_i32 = arith.constant 0 : i32
    %c0_i32_0 = arith.constant 0 : i32
    return %arg0, %c0_i32 : i32, i32
  }
}

</mosaic_0001>

<llo_original>
// kernel: tpu_custom_call.1
$region0: #{tpu_custom_call.1}
  #allocation0 [shape = 'u32[]', space=smem, size = 0x4, offset = 0x4, fixed_abs, tag = 'smem constant byte address 0x4 - core index']
  #allocation1 [shape = 'u32[144,128]{1,0:T(1,128)}', space=vmem, size = 0x12000, scoped, tag = 'internal scratch']
  #allocation2 [shape = 'f32[512,128]{1,0:T(8,128)}', space=vmem, size = 0x40000, scoped, tag = 'scratch operand']
  %s0 = inlined_call_operand.hbm [shape: bf16[2048,128], index: 0, kind: input, shape index: {}]
  %s1 = inlined_call_operand.hbm [shape: bf16[128,128], index: 1, kind: input, shape index: {}]
  %s2 = inlined_call_operand.vmem [shape: f32[1,128], index: 2, kind: input, shape index: {}]
  %s3 = inlined_call_operand.hbm [shape: bf16[2048,128], index: 3, kind: output, shape index: {}]
  %s4 = sld [smem:[#allocation0]]
  $region61: #{tpu_custom_call.1} parent=0
    _
  %s6 = ssub.s32 1, %s4
  %s7 = scalar_select 0, %s6, %s4
  $region1: #{tpu_custom_call.1} parent=0
    #allocation3 [shape = 'u8[262144]{0}', space=vmem, size = 0x40000, scoped, tag = 'input window, operand 0']
    #allocation4 [shape = 's32[2]{0}', space=sflag, size = 0x8, scoped, tag = 'scoped memory for tpu_custom_call.1']
    #allocation5 [shape = 's32[2]{0}', space=sflag, size = 0x8, scoped, tag = 'scoped memory for tpu_custom_call.1']
    #allocation6 [shape = 'u8[32768]{0}', space=vmem, size = 0x8000, scoped, tag = 'input window, operand 1, single buffered']
    #allocation7 [shape = 's32[1]{0}', space=sflag, size = 0x4, scoped, tag = 'scoped memory for tpu_custom_call.1']
    #allocation8 [shape = 'u8[262144]{0}', space=vmem, size = 0x40000, scoped, tag = 'output window, operand 0']
    %8 = vsyncpa [#allocation4], 0
    %s9 = scalar_lea.sflag [#allocation4], 1
    %10 = vsyncpa %s9, 0
    %11 = vsyncpa [#allocation7], 0
    %12 = vsyncpa [#allocation5], 0
    %s13 = scalar_lea.sflag [#allocation5], 1
    %14 = vsyncpa %s13, 0
    loop: start=0, step=1, limit=6
    $region2: #{tpu_custom_call.1} parent=1 // loop_pre_header
      _
    $region3: #{tpu_custom_call.1} parent=1 // loop_header
      %s16 = sphi 0, %s20
      %p17 = scmp.ge.s32.totalorder %s16, 6
      %s23 = sphi 0, %s35
      %s24 = sphi 0, %s31
      %s25 = sphi 0, %s23
      %s26 = sphi 0, %s24
      %s27 = sphi 0, %s25
      %s28 = sphi 0, %s26
      %s40 = sphi 0, %s42
      %s43 = sphi 0, %s40
      %s44 = sphi 0, %s43
      %s60 = sphi 0, %s44
      %s66 = sphi 0, %s68
      %s69 = sphi 0, %s66
      %s70 = sphi 0, %s69
      %s86 = sphi 0, %s70
      %s90 = sphi 0, %s90
      %s92 = sphi 0, %s90
      %s93 = sphi 0, %s92
      %s107 = sphi 0, %s93
      %s113 = sphi 0, %s115
      %s116 = sphi 0, %s113
      %s117 = sphi 0, %s116
      %s133 = sphi 0, %s117
    $region4: #{tpu_custom_call.1} parent=1 // loop_header_branch
      %19 = sbr.rel (%p17) target = $region8
    $region5: #{tpu_custom_call.1} parent=1 // loop_body
      %s21 = ssub.s32 %s16, 1
      %s22 = ssub.s32 %s16, 2
      %s29 = sadd.s32 1, %s24
      %p30 = scmp.ge.s32.totalorder %s29, 1
      %s31 = scalar_select %p30, 0, %s29
      %s32 = sadd.s32 1, %s23
      %s33 = scalar_select %p30, %s32, %s23
      %p34 = scmp.ge.s32.totalorder %s33, 4
      %s35 = scalar_select %p34, 0, %s33
      %s36 = ssub.s32 %s23, %s35
      %s37 = ssub.s32 %s24, %s31
      %s38 = sor.u32 %s36, %s37
      %p39 = scmp.eq.s32.totalorder %s38, 0
      %s41 = sadd.s32 %s40, 1
      %s42 = scalar_select %p39, %s40, %s41
      %p45 = pneg %p39
      %p46 = scmp.eq.s32.totalorder %s16, 3
      %p47 = por %p45, %p46
      %p48 = scmp.ne.s32.totalorder %s40, %s43
      %p49 = scmp.eq.s32.totalorder %s16, 0
      %p50 = por %p48, %p49
      %p51 = scmp.ne.s32.totalorder %s40, %s43
      %p52 = scmp.eq.s32.totalorder %s21, 3
      %p53 = por %p51, %p52
      %p54 = scmp.ne.s32.totalorder %s43, %s44
      %p55 = scmp.eq.s32.totalorder %s21, 0
      %p56 = por %p54, %p55
      %p57 = scmp.ne.s32.totalorder %s43, %s44
      %p58 = scmp.eq.s32.totalorder %s22, 3
      %p59 = por %p57, %p58
      %p61 = scmp.ne.s32.totalorder %s44, %s60
      %p62 = scmp.eq.s32.totalorder %s22, 0
      %p63 = por %p61, %p62
      %s64 = ssub.s32 %s24, %s31
      %p65 = scmp.eq.s32.totalorder %s64, 0
      %s67 = sadd.s32 %s66, 1
      %s68 = scalar_select %p65, %s66, %s67
      %p71 = pneg %p65
      %p72 = scmp.eq.s32.totalorder %s16, 3
      %p73 = por %p71, %p72
      %p74 = scmp.ne.s32.totalorder %s66, %s69
      %p75 = scmp.eq.s32.totalorder %s16, 0
      %p76 = por %p74, %p75
      %p77 = scmp.ne.s32.totalorder %s66, %s69
      %p78 = scmp.eq.s32.totalorder %s21, 3
      %p79 = por %p77, %p78
      %p80 = scmp.ne.s32.totalorder %s69, %s70
      %p81 = scmp.eq.s32.totalorder %s21, 0
      %p82 = por %p80, %p81
      %p83 = scmp.ne.s32.totalorder %s69, %s70
      %p84 = scmp.eq.s32.totalorder %s22, 3
      %p85 = por %p83, %p84
      %p87 = scmp.ne.s32.totalorder %s70, %s86
      %p88 = scmp.eq.s32.totalorder %s22, 0
      %p89 = por %p87, %p88
      %s91 = sadd.s32 %s90, 1
      %p94 = scmp.eq.s32.totalorder %s16, 3
      %p95 = scmp.ne.s32.totalorder %s90, %s92
      %p96 = scmp.eq.s32.totalorder %s16, 0
      %p97 = por %p95, %p96
      %p98 = scmp.ne.s32.totalorder %s90, %s92
      %p99 = scmp.eq.s32.totalorder %s21, 3
      %p100 = por %p98, %p99
      %p101 = scmp.ne.s32.totalorder %s92, %s93
      %p102 = scmp.eq.s32.totalorder %s21, 0
      %p103 = por %p101, %p102
      %p104 = scmp.ne.s32.totalorder %s92, %s93
      %p105 = scmp.eq.s32.totalorder %s22, 3
      %p106 = por %p104, %p105
      %p108 = scmp.ne.s32.totalorder %s93, %s107
      %p109 = scmp.eq.s32.totalorder %s22, 0
      %p110 = por %p108, %p109
      %s111 = ssub.s32 %s23, %s35
      %p112 = scmp.eq.s32.totalorder %s111, 0
      %s114 = sadd.s32 %s113, 1
      %s115 = scalar_select %p112, %s113, %s114
      %p118 = pneg %p112
      %p119 = scmp.eq.s32.totalorder %s16, 3
      %p120 = por %p118, %p119
      %p121 = scmp.ne.s32.totalorder %s113, %s116
      %p122 = scmp.eq.s32.totalorder %s16, 0
      %p123 = por %p121, %p122
      %p124 = scmp.ne.s32.totalorder %s113, %s116
      %p125 = scmp.eq.s32.totalorder %s21, 3
      %p126 = por %p124, %p125
      %p127 = scmp.ne.s32.totalorder %s116, %s117
      %p128 = scmp.eq.s32.totalorder %s21, 0
      %p129 = por %p127, %p128
      %p130 = scmp.ne.s32.totalorder %s116, %s117
      %p131 = scmp.eq.s32.totalorder %s22, 3
      %p132 = por %p130, %p131
      %p134 = scmp.ne.s32.totalorder %s117, %s133
      %p135 = scmp.eq.s32.totalorder %s22, 0
      %p136 = por %p134, %p135
      %p137 = scmp.le.s32.totalorder 1, %s16
      %p138 = scmp.lt.s32.totalorder %s16, 5
      %p139 = pnand %p137, %p138
      %p140 = pneg %p139
      // Predicated region
      $region9: #{tpu_custom_call.1} parent=5 // pred_check
        _
      $region10: #{tpu_custom_call.1} parent=5 // pred_check_branch
        %142 = sbr.rel (%p139) target = $region12
      $region11: #{tpu_custom_call.1} parent=5 // pred_region
        %s143 = ssub.s32 %s16, 1
        // Predicated region
        $region13: #{tpu_custom_call.1} parent=11 // pred_check
          %p144 = pneg %p82
        $region14: #{tpu_custom_call.1} parent=11 // pred_check_branch
          %146 = sbr.rel (%p144) target = $region16
        $region15: #{tpu_custom_call.1} parent=11 // pred_region
          %s147 = smul.u32 16, %s26
          %s149 = ssub.s32 1024, 1024
          %150 = vsyncadd [#allocation7], %s149
          %s151 = smul.addr %s147, 64
          %s152 = scalar_lea.hbm %s1, %s151
          %s153 = sshll.u32 [#allocation6], 4
          %s154 = int_to_ptr.vmem [resolvable:$true] %s153
          %159 = dma.hbm_to_vmem [thread:$0]  %s152, 1024, %s154, [#allocation7], 64, 64, 4
        $region16: #{tpu_custom_call.1} parent=11 // pred_fallthru
          _
        // Predicated region
        $region17: #{tpu_custom_call.1} parent=11 // pred_check
          %p160 = pneg %p103
        $region18: #{tpu_custom_call.1} parent=11 // pred_check_branch
          %162 = sbr.rel (%p160) target = $region20
        $region19: #{tpu_custom_call.1} parent=11 // pred_region
          _
        $region20: #{tpu_custom_call.1} parent=11 // pred_fallthru
          _
      $region12: #{tpu_custom_call.1} parent=5 // pred_fallthru
        _
      %p163 = scmp.lt.s32.totalorder %s16, 4
      // Predicated region
      $region21: #{tpu_custom_call.1} parent=5 // pred_check
        %p164 = pneg %p163
      $region22: #{tpu_custom_call.1} parent=5 // pred_check_branch
        %166 = sbr.rel (%p164) target = $region24
      $region23: #{tpu_custom_call.1} parent=5 // pred_region
        // Predicated region
        $region25: #{tpu_custom_call.1} parent=23 // pred_check
          %p167 = pneg %p50
        $region26: #{tpu_custom_call.1} parent=23 // pred_check_branch
          %169 = sbr.rel (%p167) target = $region28
        $region27: #{tpu_custom_call.1} parent=23 // pred_region
          %s170 = sand.u32 %s40, 1
          %s171 = scalar_lea.sflag [#allocation4], %s170
          %s172 = sand.u32 %s40, 1
          %s173 = smul.addr %s172, 256
          %s174 = scalar_lea.vmem [#allocation3], %s173
          %s175 = smul.u32 64, %s23
          %s177 = ssub.s32 4096, 4096
          %178 = vsyncadd %s171, %s177
          %s179 = sadd.s32 %s24, %s175
          %s180 = smul.addr %s179, 64
          %s181 = scalar_lea.hbm %s0, %s180
          %s182 = sshll.u32 %s174, 4
          %s183 = int_to_ptr.vmem [resolvable:$true] %s182
          %188 = dma.hbm_to_vmem [thread:$0]  %s181, 4096, %s183, %s171, 64, 64, 4
        $region28: #{tpu_custom_call.1} parent=23 // pred_fallthru
          _
      $region24: #{tpu_custom_call.1} parent=5 // pred_fallthru
        _
      %p189 = scmp.le.s32.totalorder 1, %s16
      %p190 = scmp.lt.s32.totalorder %s16, 5
      %p191 = pnand %p189, %p190
      %p192 = pneg %p191
      // Predicated region
      $region29: #{tpu_custom_call.1} parent=5 // pred_check
        _
      $region30: #{tpu_custom_call.1} parent=5 // pred_check_branch
        %194 = sbr.rel (%p191) target = $region32
      $region31: #{tpu_custom_call.1} parent=5 // pred_region
        %s195 = ssub.s32 %s16, 1
        %s196 = sand.u32 %s43, 1
        %s197 = scalar_lea.sflag [#allocation4], %s196
        %s198 = sand.u32 %s43, 1
        %s199 = smul.addr %s198, 256
        %s200 = scalar_lea.vmem [#allocation3], %s199
        // Predicated region
        $region33: #{tpu_custom_call.1} parent=31 // pred_check
          %p201 = pneg %p56
        $region34: #{tpu_custom_call.1} parent=31 // pred_check_branch
          %203 = sbr.rel (%p201) target = $region36
        $region35: #{tpu_custom_call.1} parent=31 // pred_region
          %204 = dma.done %s197, 4096
        $region36: #{tpu_custom_call.1} parent=31 // pred_fallthru
          _
        // Predicated region
        $region37: #{tpu_custom_call.1} parent=31 // pred_check
          %p205 = pneg %p82
        $region38: #{tpu_custom_call.1} parent=31 // pred_check_branch
          %207 = sbr.rel (%p205) target = $region40
        $region39: #{tpu_custom_call.1} parent=31 // pred_region
          %208 = dma.done [#allocation7], 1024
        $region40: #{tpu_custom_call.1} parent=31 // pred_fallthru
          _
        %s209 = sand.u32 %s43, 1
        %s210 = scalar_lea.sflag [#allocation4], %s209
        %s211 = sand.u32 %s43, 1
        %s212 = smul.addr %s211, 256
        %s213 = scalar_lea.vmem [#allocation3], %s212
        %p214 = pneg %p56
        %p215 = pneg %p53
        %p216 = pneg %p82
        %p217 = pneg %p79
        %p218 = pneg %p103
        %p219 = pneg %p100
        %p220 = pneg %p129
        %p221 = pneg %p126
        %s222 = sand.u32 %s116, 1
        %s223 = scalar_lea.sflag [#allocation5], %s222
        %s224 = sand.u32 %s116, 1
        %s225 = smul.addr %s224, 256
        %s226 = scalar_lea.vmem [#allocation8], %s225
        %s227 = smul.u32 64, %s25
        %s228 = smul.u32 16, %s26
        %s229 = smul.u32 64, %s25
        %p231 = scmp.eq.s32.totalorder %s26, 0
        // Predicated region
        $region41: #{tpu_custom_call.1} parent=31 // pred_check
          %p232 = pneg %p231
        $region42: #{tpu_custom_call.1} parent=31 // pred_check_branch
          %234 = sbr.rel (%p232) target = $region44
        $region43: #{tpu_custom_call.1} parent=31 // pred_region
          %235 = vst [vmem:[#allocation2] sm:$0xff] 0.0
          %236 = vst [vmem:[#allocation2 + $0x8] sm:$0xff] 0.0
          %237 = vst [vmem:[#allocation2 + $0x10] sm:$0xff] 0.0
          %238 = vst [vmem:[#allocation2 + $0x18] sm:$0xff] 0.0
          %239 = vst [vmem:[#allocation2 + $0x20] sm:$0xff] 0.0
          %240 = vst [vmem:[#allocation2 + $0x28] sm:$0xff] 0.0
          %241 = vst [vmem:[#allocation2 + $0x30] sm:$0xff] 0.0
          %242 = vst [vmem:[#allocation2 + $0x38] sm:$0xff] 0.0
          %243 = vst [vmem:[#allocation2 + $0x40] sm:$0xff] 0.0
          %244 = vst [vmem:[#allocation2 + $0x48] sm:$0xff] 0.0
          %245 = vst [vmem:[#allocation2 + $0x50] sm:$0xff] 0.0
          %246 = vst [vmem:[#allocation2 + $0x58] sm:$0xff] 0.0
          %247 = vst [vmem:[#allocation2 + $0x60] sm:$0xff] 0.0
          %248 = vst [vmem:[#allocation2 + $0x68] sm:$0xff] 0.0
          %249 = vst [vmem:[#allocation2 + $0x70] sm:$0xff] 0.0
          %250 = vst [vmem:[#allocation2 + $0x78] sm:$0xff] 0.0
          %251 = vst [vmem:[#allocation2 + $0x80] sm:$0xff] 0.0
          %252 = vst [vmem:[#allocation2 + $0x88] sm:$0xff] 0.0
          %253 = vst [vmem:[#allocation2 + $0x90] sm:$0xff] 0.0
          %254 = vst [vmem:[#allocation2 + $0x98] sm:$0xff] 0.0
          %255 = vst [vmem:[#allocation2 + $0xa0] sm:$0xff] 0.0
          %256 = vst [vmem:[#allocation2 + $0xa8] sm:$0xff] 0.0
          %257 = vst [vmem:[#allocation2 + $0xb0] sm:$0xff] 0.0
          %258 = vst [vmem:[#allocation2 + $0xb8] sm:$0xff] 0.0
          %259 = vst [vmem:[#allocation2 + $0xc0] sm:$0xff] 0.0
          %260 = vst [vmem:[#allocation2 + $0xc8] sm:$0xff] 0.0
          %261 = vst [vmem:[#allocation2 + $0xd0] sm:$0xff] 0.0
          %262 = vst [vmem:[#allocation2 + $0xd8] sm:$0xff] 0.0
          %263 = vst [vmem:[#allocation2 + $0xe0] sm:$0xff] 0.0
          %264 = vst [vmem:[#allocation2 + $0xe8] sm:$0xff] 0.0
          %265 = vst [vmem:[#allocation2 + $0xf0] sm:$0xff] 0.0
          %266 = vst [vmem:[#allocation2 + $0xf8] sm:$0xff] 0.0
          %267 = vst [vmem:[#allocation2 + $0x100] sm:$0xff] 0.0
          %268 = vst [vmem:[#allocation2 + $0x108] sm:$0xff] 0.0
          %269 = vst [vmem:[#allocation2 + $0x110] sm:$0xff] 0.0
          %270 = vst [vmem:[#allocation2 + $0x118] sm:$0xff] 0.0
          %271 = vst [vmem:[#allocation2 + $0x120] sm:$0xff] 0.0
          %272 = vst [vmem:[#allocation2 + $0x128] sm:$0xff] 0.0
          %273 = vst [vmem:[#allocation2 + $0x130] sm:$0xff] 0.0
          %274 = vst [vmem:[#allocation2 + $0x138] sm:$0xff] 0.0
          %275 = vst [vmem:[#allocation2 + $0x140] sm:$0xff] 0.0
          %276 = vst [vmem:[#allocation2 + $0x148] sm:$0xff] 0.0
          %277 = vst [vmem:[#allocation2 + $0x150] sm:$0xff] 0.0
          %278 = vst [vmem:[#allocation2 + $0x158] sm:$0xff] 0.0
          %279 = vst [vmem:[#allocation2 + $0x160] sm:$0xff] 0.0
          %280 = vst [vmem:[#allocation2 + $0x168] sm:$0xff] 0.0
          %281 = vst [vmem:[#allocation2 + $0x170] sm:$0xff] 0.0
          %282 = vst [vmem:[#allocation2 + $0x178] sm:$0xff] 0.0
          %283 = vst [vmem:[#allocation2 + $0x180] sm:$0xff] 0.0
          %284 = vst [vmem:[#allocation2 + $0x188] sm:$0xff] 0.0
          %285 = vst [vmem:[#allocation2 + $0x190] sm:$0xff] 0.0
          %286 = vst [vmem:[#allocation2 + $0x198] sm:$0xff] 0.0
          %287 = vst [vmem:[#allocation2 + $0x1a0] sm:$0xff] 0.0
          %288 = vst [vmem:[#allocation2 + $0x1a8] sm:$0xff] 0.0
          %289 = vst [vmem:[#allocation2 + $0x1b0] sm:$0xff] 0.0
          %290 = vst [vmem:[#allocation2 + $0x1b8] sm:$0xff] 0.0
          %291 = vst [vmem:[#allocation2 + $0x1c0] sm:$0xff] 0.0
          %292 = vst [vmem:[#allocation2 + $0x1c8] sm:$0xff] 0.0
          %293 = vst [vmem:[#allocation2 + $0x1d0] sm:$0xff] 0.0
          %294 = vst [vmem:[#allocation2 + $0x1d8] sm:$0xff] 0.0
          %295 = vst [vmem:[#allocation2 + $0x1e0] sm:$0xff] 0.0
          %296 = vst [vmem:[#allocation2 + $0x1e8] sm:$0xff] 0.0
          %297 = vst [vmem:[#allocation2 + $0x1f0] sm:$0xff] 0.0
          %298 = vst [vmem:[#allocation2 + $0x1f8] sm:$0xff] 0.0
        $region44: #{tpu_custom_call.1} parent=31 // pred_fallthru
          _
        %v299 = vld [vmem:[#allocation2] sm:$0xff]
        %v300 = vld [vmem:[#allocation2 + $0x8] sm:$0xff]
        %v301 = vld [vmem:[#allocation2 + $0x10] sm:$0xff]
        %v302 = vld [vmem:[#allocation2 + $0x18] sm:$0xff]
        %v303 = vld [vmem:[#allocation2 + $0x20] sm:$0xff]
        %v304 = vld [vmem:[#allocation2 + $0x28] sm:$0xff]
        %v305 = vld [vmem:[#allocation2 + $0x30] sm:$0xff]
        %v306 = vld [vmem:[#allocation2 + $0x38] sm:$0xff]
        %v307 = vld [vmem:[#allocation2 + $0x40] sm:$0xff]
        %v308 = vld [vmem:[#allocation2 + $0x48] sm:$0xff]
        %v309 = vld [vmem:[#allocation2 + $0x50] sm:$0xff]
        %v310 = vld [vmem:[#allocation2 + $0x58] sm:$0xff]
        %v311 = vld [vmem:[#allocation2 + $0x60] sm:$0xff]
        %v312 = vld [vmem:[#allocation2 + $0x68] sm:$0xff]
        %v313 = vld [vmem:[#allocation2 + $0x70] sm:$0xff]
        %v314 = vld [vmem:[#allocation2 + $0x78] sm:$0xff]
        %v315 = vld [vmem:[#allocation2 + $0x80] sm:$0xff]
        %v316 = vld [vmem:[#allocation2 + $0x88] sm:$0xff]
        %v317 = vld [vmem:[#allocation2 + $0x90] sm:$0xff]
        %v318 = vld [vmem:[#allocation2 + $0x98] sm:$0xff]
        %v319 = vld [vmem:[#allocation2 + $0xa0] sm:$0xff]
        %v320 = vld [vmem:[#allocation2 + $0xa8] sm:$0xff]
        %v321 = vld [vmem:[#allocation2 + $0xb0] sm:$0xff]
        %v322 = vld [vmem:[#allocation2 + $0xb8] sm:$0xff]
        %v323 = vld [vmem:[#allocation2 + $0xc0] sm:$0xff]
        %v324 = vld [vmem:[#allocation2 + $0xc8] sm:$0xff]
        %v325 = vld [vmem:[#allocation2 + $0xd0] sm:$0xff]
        %v326 = vld [vmem:[#allocation2 + $0xd8] sm:$0xff]
        %v327 = vld [vmem:[#allocation2 + $0xe0] sm:$0xff]
        %v328 = vld [vmem:[#allocation2 + $0xe8] sm:$0xff]
        %v329 = vld [vmem:[#allocation2 + $0xf0] sm:$0xff]
        %v330 = vld [vmem:[#allocation2 + $0xf8] sm:$0xff]
        %v331 = vld [vmem:[#allocation2 + $0x100] sm:$0xff]
        %v332 = vld [vmem:[#allocation2 + $0x108] sm:$0xff]
        %v333 = vld [vmem:[#allocation2 + $0x110] sm:$0xff]
        %v334 = vld [vmem:[#allocation2 + $0x118] sm:$0xff]
        %v335 = vld [vmem:[#allocation2 + $0x120] sm:$0xff]
        %v336 = vld [vmem:[#allocation2 + $0x128] sm:$0xff]
        %v337 = vld [vmem:[#allocation2 + $0x130] sm:$0xff]
        %v338 = vld [vmem:[#allocation2 + $0x138] sm:$0xff]
        %v339 = vld [vmem:[#allocation2 + $0x140] sm:$0xff]
        %v340 = vld [vmem:[#allocation2 + $0x148] sm:$0xff]
        %v341 = vld [vmem:[#allocation2 + $0x150] sm:$0xff]
        %v342 = vld [vmem:[#allocation2 + $0x158] sm:$0xff]
        %v343 = vld [vmem:[#allocation2 + $0x160] sm:$0xff]
        %v344 = vld [vmem:[#allocation2 + $0x168] sm:$0xff]
        %v345 = vld [vmem:[#allocation2 + $0x170] sm:$0xff]
        %v346 = vld [vmem:[#allocation2 + $0x178] sm:$0xff]
        %v347 = vld [vmem:[#allocation2 + $0x180] sm:$0xff]
        %v348 = vld [vmem:[#allocation2 + $0x188] sm:$0xff]
        %v349 = vld [vmem:[#allocation2 + $0x190] sm:$0xff]
        %v350 = vld [vmem:[#allocation2 + $0x198] sm:$0xff]
        %v351 = vld [vmem:[#allocation2 + $0x1a0] sm:$0xff]
        %v352 = vld [vmem:[#allocation2 + $0x1a8] sm:$0xff]
        %v353 = vld [vmem:[#allocation2 + $0x1b0] sm:$0xff]
        %v354 = vld [vmem:[#allocation2 + $0x1b8] sm:$0xff]
        %v355 = vld [vmem:[#allocation2 + $0x1c0] sm:$0xff]
        %v356 = vld [vmem:[#allocation2 + $0x1c8] sm:$0xff]
        %v357 = vld [vmem:[#allocation2 + $0x1d0] sm:$0xff]
        %v358 = vld [vmem:[#allocation2 + $0x1d8] sm:$0xff]
        %v359 = vld [vmem:[#allocation2 + $0x1e0] sm:$0xff]
        %v360 = vld [vmem:[#allocation2 + $0x1e8] sm:$0xff]
        %v361 = vld [vmem:[#allocation2 + $0x1f0] sm:$0xff]
        %v362 = vld [vmem:[#allocation2 + $0x1f8] sm:$0xff]
        %v363 = vld [vmem:[%s200] sm:$0xf]
        %v364 = vld [vmem:[%s200 + $0x4] sm:$0xf]
        %v365 = vld [vmem:[%s200 + $0x8] sm:$0xf]
        %v366 = vld [vmem:[%s200 + $0xc] sm:$0xf]
        %v367 = vld [vmem:[%s200 + $0x10] sm:$0xf]
        %v368 = vld [vmem:[%s200 + $0x14] sm:$0xf]
        %v369 = vld [vmem:[%s200 + $0x18] sm:$0xf]
        %v370 = vld [vmem:[%s200 + $0x1c] sm:$0xf]
        %v371 = vld [vmem:[%s200 + $0x20] sm:$0xf]
        %v372 = vld [vmem:[%s200 + $0x24] sm:$0xf]
        %v373 = vld [vmem:[%s200 + $0x28] sm:$0xf]
        %v374 = vld [vmem:[%s200 + $0x2c] sm:$0xf]
        %v375 = vld [vmem:[%s200 + $0x30] sm:$0xf]
        %v376 = vld [vmem:[%s200 + $0x34] sm:$0xf]
        %v377 = vld [vmem:[%s200 + $0x38] sm:$0xf]
        %v378 = vld [vmem:[%s200 + $0x3c] sm:$0xf]
        %v379 = vld [vmem:[%s200 + $0x40] sm:$0xf]
        %v380 = vld [vmem:[%s200 + $0x44] sm:$0xf]
        %v381 = vld [vmem:[%s200 + $0x48] sm:$0xf]
        %v382 = vld [vmem:[%s200 + $0x4c] sm:$0xf]
        %v383 = vld [vmem:[%s200 + $0x50] sm:$0xf]
        %v384 = vld [vmem:[%s200 + $0x54] sm:$0xf]
        %v385 = vld [vmem:[%s200 + $0x58] sm:$0xf]
        %v386 = vld [vmem:[%s200 + $0x5c] sm:$0xf]
        %v387 = vld [vmem:[%s200 + $0x60] sm:$0xf]
        %v388 = vld [vmem:[%s200 + $0x64] sm:$0xf]
        %v389 = vld [vmem:[%s200 + $0x68] sm:$0xf]
        %v390 = vld [vmem:[%s200 + $0x6c] sm:$0xf]
        %v391 = vld [vmem:[%s200 + $0x70] sm:$0xf]
        %v392 = vld [vmem:[%s200 + $0x74] sm:$0xf]
        %v393 = vld [vmem:[%s200 + $0x78] sm:$0xf]
        %v394 = vld [vmem:[%s200 + $0x7c] sm:$0xf]
        %v395 = vld [vmem:[%s200 + $0x80] sm:$0xf]
        %v396 = vld [vmem:[%s200 + $0x84] sm:$0xf]
        %v397 = vld [vmem:[%s200 + $0x88] sm:$0xf]
        %v398 = vld [vmem:[%s200 + $0x8c] sm:$0xf]
        %v399 = vld [vmem:[%s200 + $0x90] sm:$0xf]
        %v400 = vld [vmem:[%s200 + $0x94] sm:$0xf]
        %v401 = vld [vmem:[%s200 + $0x98] sm:$0xf]
        %v402 = vld [vmem:[%s200 + $0x9c] sm:$0xf]
        %v403 = vld [vmem:[%s200 + $0xa0] sm:$0xf]
        %v404 = vld [vmem:[%s200 + $0xa4] sm:$0xf]
        %v405 = vld [vmem:[%s200 + $0xa8] sm:$0xf]
        %v406 = vld [vmem:[%s200 + $0xac] sm:$0xf]
        %v407 = vld [vmem:[%s200 + $0xb0] sm:$0xf]
        %v408 = vld [vmem:[%s200 + $0xb4] sm:$0xf]
        %v409 = vld [vmem:[%s200 + $0xb8] sm:$0xf]
        %v410 = vld [vmem:[%s200 + $0xbc] sm:$0xf]
        %v411 = vld [vmem:[%s200 + $0xc0] sm:$0xf]
        %v412 = vld [vmem:[%s200 + $0xc4] sm:$0xf]
        %v413 = vld [vmem:[%s200 + $0xc8] sm:$0xf]
        %v414 = vld [vmem:[%s200 + $0xcc] sm:$0xf]
        %v415 = vld [vmem:[%s200 + $0xd0] sm:$0xf]
        %v416 = vld [vmem:[%s200 + $0xd4] sm:$0xf]
        %v417 = vld [vmem:[%s200 + $0xd8] sm:$0xf]
        %v418 = vld [vmem:[%s200 + $0xdc] sm:$0xf]
        %v419 = vld [vmem:[%s200 + $0xe0] sm:$0xf]
        %v420 = vld [vmem:[%s200 + $0xe4] sm:$0xf]
        %v421 = vld [vmem:[%s200 + $0xe8] sm:$0xf]
        %v422 = vld [vmem:[%s200 + $0xec] sm:$0xf]
        %v423 = vld [vmem:[%s200 + $0xf0] sm:$0xf]
        %v424 = vld [vmem:[%s200 + $0xf4] sm:$0xf]
        %v425 = vld [vmem:[%s200 + $0xf8] sm:$0xf]
        %v426 = vld [vmem:[%s200 + $0xfc] sm:$0xf]
        %v427 = vld [vmem:[#allocation6] sm:$0xf]
        %v428 = vld [vmem:[#allocation6 + $0x4] sm:$0xf]
        %v429 = vld [vmem:[#allocation6 + $0x8] sm:$0xf]
        %v430 = vld [vmem:[#allocation6 + $0xc] sm:$0xf]
        %v431 = vld [vmem:[#allocation6 + $0x10] sm:$0xf]
        %v432 = vld [vmem:[#allocation6 + $0x14] sm:$0xf]
        %v433 = vld [vmem:[#allocation6 + $0x18] sm:$0xf]
        %v434 = vld [vmem:[#allocation6 + $0x1c] sm:$0xf]
        %v435 = vld [vmem:[#allocation6 + $0x20] sm:$0xf]
        %v436 = vld [vmem:[#allocation6 + $0x24] sm:$0xf]
        %v437 = vld [vmem:[#allocation6 + $0x28] sm:$0xf]
        %v438 = vld [vmem:[#allocation6 + $0x2c] sm:$0xf]
        %v439 = vld [vmem:[#allocation6 + $0x30] sm:$0xf]
        %v440 = vld [vmem:[#allocation6 + $0x34] sm:$0xf]
        %v441 = vld [vmem:[#allocation6 + $0x38] sm:$0xf]
        %v442 = vld [vmem:[#allocation6 + $0x3c] sm:$0xf]
        %v507 = vunpack.c.l.b16 %v363
        %v508 = vunpack.c.l.b16 %v364
        %v509 = vunpack.c.l.b16 %v365
        %v510 = vunpack.c.l.b16 %v366
        %v511 = vunpack.c.l.b16 %v367
        %v512 = vunpack.c.l.b16 %v368
        %v513 = vunpack.c.l.b16 %v369
        %v514 = vunpack.c.l.b16 %v370
        %v515 = vunpack.c.l.b16 %v371
        %v516 = vunpack.c.l.b16 %v372
        %v517 = vunpack.c.l.b16 %v373
        %v518 = vunpack.c.l.b16 %v374
        %v519 = vunpack.c.l.b16 %v375
        %v520 = vunpack.c.l.b16 %v376
        %v521 = vunpack.c.l.b16 %v377
        %v522 = vunpack.c.l.b16 %v378
        %v523 = vunpack.c.l.b16 %v379
        %v524 = vunpack.c.l.b16 %v380
        %v525 = vunpack.c.l.b16 %v381
        %v526 = vunpack.c.l.b16 %v382
        %v527 = vunpack.c.l.b16 %v383
        %v528 = vunpack.c.l.b16 %v384
        %v529 = vunpack.c.l.b16 %v385
        %v530 = vunpack.c.l.b16 %v386
        %v531 = vunpack.c.l.b16 %v387
        %v532 = vunpack.c.l.b16 %v388
        %v533 = vunpack.c.l.b16 %v389
        %v534 = vunpack.c.l.b16 %v390
        %v535 = vunpack.c.l.b16 %v391
        %v536 = vunpack.c.l.b16 %v392
        %v537 = vunpack.c.l.b16 %v393
        %v538 = vunpack.c.l.b16 %v394
        %v539 = vunpack.c.l.b16 %v395
        %v540 = vunpack.c.l.b16 %v396
        %v541 = vunpack.c.l.b16 %v397
        %v542 = vunpack.c.l.b16 %v398
        %v543 = vunpack.c.l.b16 %v399
        %v544 = vunpack.c.l.b16 %v400
        %v545 = vunpack.c.l.b16 %v401
        %v546 = vunpack.c.l.b16 %v402
        %v547 = vunpack.c.l.b16 %v403
        %v548 = vunpack.c.l.b16 %v404
        %v549 = vunpack.c.l.b16 %v405
        %v550 = vunpack.c.l.b16 %v406
        %v551 = vunpack.c.l.b16 %v407
        %v552 = vunpack.c.l.b16 %v408
        %v553 = vunpack.c.l.b16 %v409
        %v554 = vunpack.c.l.b16 %v410
        %v555 = vunpack.c.l.b16 %v411
        %v556 = vunpack.c.l.b16 %v412
        %v557 = vunpack.c.l.b16 %v413
        %v558 = vunpack.c.l.b16 %v414
        %v559 = vunpack.c.l.b16 %v415
        %v560 = vunpack.c.l.b16 %v416
        %v561 = vunpack.c.l.b16 %v417
        %v562 = vunpack.c.l.b16 %v418
        %v563 = vunpack.c.l.b16 %v419
        %v564 = vunpack.c.l.b16 %v420
        %v565 = vunpack.c.l.b16 %v421
        %v566 = vunpack.c.l.b16 %v422
        %v567 = vunpack.c.l.b16 %v423
        %v568 = vunpack.c.l.b16 %v424
        %v569 = vunpack.c.l.b16 %v425
        %v570 = vunpack.c.l.b16 %v426
        %v571 = vpack.c.b16 %v508, %v507
        %v572 = vpack.c.b16 %v510, %v509
        %v573 = vpack.c.b16 %v512, %v511
        %v574 = vpack.c.b16 %v514, %v513
        %v575 = vpack.c.b16 %v516, %v515
        %v576 = vpack.c.b16 %v518, %v517
        %v577 = vpack.c.b16 %v520, %v519
        %v578 = vpack.c.b16 %v522, %v521
        %v579 = vpack.c.b16 %v524, %v523
        %v580 = vpack.c.b16 %v526, %v525
        %v581 = vpack.c.b16 %v528, %v527
        %v582 = vpack.c.b16 %v530, %v529
        %v583 = vpack.c.b16 %v532, %v531
        %v584 = vpack.c.b16 %v534, %v533
        %v585 = vpack.c.b16 %v536, %v535
        %v586 = vpack.c.b16 %v538, %v537
        %v587 = vpack.c.b16 %v540, %v539
        %v588 = vpack.c.b16 %v542, %v541
        %v589 = vpack.c.b16 %v544, %v543
        %v590 = vpack.c.b16 %v546, %v545
        %v591 = vpack.c.b16 %v548, %v547
        %v592 = vpack.c.b16 %v550, %v549
        %v593 = vpack.c.b16 %v552, %v551
        %v594 = vpack.c.b16 %v554, %v553
        %v595 = vpack.c.b16 %v556, %v555
        %v596 = vpack.c.b16 %v558, %v557
        %v597 = vpack.c.b16 %v560, %v559
        %v598 = vpack.c.b16 %v562, %v561
        %v599 = vpack.c.b16 %v564, %v563
        %v600 = vpack.c.b16 %v566, %v565
        %v601 = vpack.c.b16 %v568, %v567
        %v602 = vpack.c.b16 %v570, %v569
        %v651 = vunpack.c.l.b16 %v427
        %v652 = vunpack.c.l.b16 %v428
        %v653 = vunpack.c.l.b16 %v429
        %v654 = vunpack.c.l.b16 %v430
        %v655 = vunpack.c.l.b16 %v431
        %v656 = vunpack.c.l.b16 %v432
        %v657 = vunpack.c.l.b16 %v433
        %v658 = vunpack.c.l.b16 %v434
        %v659 = vunpack.c.l.b16 %v435
        %v660 = vunpack.c.l.b16 %v436
        %v661 = vunpack.c.l.b16 %v437
        %v662 = vunpack.c.l.b16 %v438
        %v663 = vunpack.c.l.b16 %v439
        %v664 = vunpack.c.l.b16 %v440
        %v665 = vunpack.c.l.b16 %v441
        %v666 = vunpack.c.l.b16 %v442
        %v667 = vpack.c.b16 %v652, %v651
        %v668 = vpack.c.b16 %v654, %v653
        %v669 = vpack.c.b16 %v656, %v655
        %v670 = vpack.c.b16 %v658, %v657
        %v671 = vpack.c.b16 %v660, %v659
        %v672 = vpack.c.b16 %v662, %v661
        %v673 = vpack.c.b16 %v664, %v663
        %v674 = vpack.c.b16 %v666, %v665
        %683 = vmatprep.subr.bf16.mxu0 0
        %684 = vmatpush1.bf16.msra.mxu0 %v667
        %685 = vmatprep.subr.bf16.mxu0 0
        %686 = vmatpush1.bf16.msra.mxu0 %v668
        %687 = vmatprep.subr.bf16.mxu0 0
        %688 = vmatpush1.bf16.msra.mxu0 %v669
        %689 = vmatprep.subr.bf16.mxu0 0
        %690 = vmatpush1.bf16.msra.mxu0 %v670
        %691 = vmatprep.subr.bf16.mxu0 0
        %692 = vmatpush1.bf16.msra.mxu0 %v671
        %693 = vmatprep.subr.bf16.mxu0 0
        %694 = vmatpush1.bf16.msra.mxu0 %v672
        %695 = vmatprep.subr.bf16.mxu0 0
        %696 = vmatpush1.bf16.msra.mxu0 %v673
        %697 = vmatprep.subr.bf16.mxu0 0
        %698 = vmatpush1.bf16.msra.mxu0 %v674
        %699 = vmatprep.subr.bf16.mxu0 0
        %700 = vmatpush1.bf16.msra.mxu0 0
        %701 = vmatprep.subr.bf16.mxu0 0
        %702 = vmatpush1.bf16.msra.mxu0 0
        %703 = vmatprep.subr.bf16.mxu0 0
        %704 = vmatpush1.bf16.msra.mxu0 0
        %705 = vmatprep.subr.bf16.mxu0 0
        %706 = vmatpush1.bf16.msra.mxu0 0
        %707 = vmatprep.subr.bf16.mxu0 0
        %708 = vmatpush1.bf16.msra.mxu0 0
        %709 = vmatprep.subr.bf16.mxu0 0
        %710 = vmatpush1.bf16.msra.mxu0 0
        %711 = vmatprep.subr.bf16.mxu0 0
        %712 = vmatpush1.bf16.msra.mxu0 0
        %713 = vmatprep.subr.bf16.mxu0 0
        %714 = vmatpush1.bf16.msra.mxu0 0
        %715 = vmatprep.mubr.bf16.mxu0 0
        %716 = vmatmul.mubr.bf16.gmra.mrb[0].mxu0 %v571
        %v717 = vpop.f32.mrb[0].mxu0
        %v718 = vadd.f32 0.0, %v717
        %v719 = vpop.f32.mrb[0].mxu0
        %v720 = vpop.f32.mrb[0].mxu0
        %v721 = vadd.f32 0.0, %v720
        %v722 = vpop.f32.mrb[0].mxu0
        %723 = vmatprep.mubr.bf16.mxu0 0
        %724 = vmatmul.mubr.bf16.gmra.mrb[0].mxu0 %v572
        %v725 = vpop.f32.mrb[0].mxu0
        %v726 = vadd.f32 0.0, %v725
        %v727 = vpop.f32.mrb[0].mxu0
        %v728 = vpop.f32.mrb[0].mxu0
        %v729 = vadd.f32 0.0, %v728
        %v730 = vpop.f32.mrb[0].mxu0
        %731 = vmatprep.mubr.bf16.mxu0 0
        %732 = vmatmul.mubr.bf16.gmra.mrb[0].mxu0 %v573
        %v733 = vpop.f32.mrb[0].mxu0
        %v734 = vadd.f32 0.0, %v733
        %v735 = vpop.f32.mrb[0].mxu0
        %v736 = vpop.f32.mrb[0].mxu0
        %v737 = vadd.f32 0.0, %v736
        %v738 = vpop.f32.mrb[0].mxu0
        %739 = vmatprep.mubr.bf16.mxu0 0
        %740 = vmatmul.mubr.bf16.gmra.mrb[0].mxu0 %v574
        %v741 = vpop.f32.mrb[0].mxu0
        %v742 = vadd.f32 0.0, %v741
        %v743 = vpop.f32.mrb[0].mxu0
        %v744 = vpop.f32.mrb[0].mxu0
        %v745 = vadd.f32 0.0, %v744
        %v746 = vpop.f32.mrb[0].mxu0
        %747 = vmatprep.mubr.bf16.mxu0 0
        %748 = vmatmul.mubr.bf16.gmra.mrb[0].mxu0 %v575
        %v749 = vpop.f32.mrb[0].mxu0
        %v750 = vadd.f32 0.0, %v749
        %v751 = vpop.f32.mrb[0].mxu0
        %v752 = vpop.f32.mrb[0].mxu0
        %v753 = vadd.f32 0.0, %v752
        %v754 = vpop.f32.mrb[0].mxu0
        %755 = vmatprep.mubr.bf16.mxu0 0
        %756 = vmatmul.mubr.bf16.gmra.mrb[0].mxu0 %v576
        %v757 = vpop.f32.mrb[0].mxu0
        %v758 = vadd.f32 0.0, %v757
        %v759 = vpop.f32.mrb[0].mxu0
        %v760 = vpop.f32.mrb[0].mxu0
        %v761 = vadd.f32 0.0, %v760
        %v762 = vpop.f32.mrb[0].mxu0
        %763 = vmatprep.mubr.bf16.mxu0 0
        %764 = vmatmul.mubr.bf16.gmra.mrb[0].mxu0 %v577
        %v765 = vpop.f32.mrb[0].mxu0
        %v766 = vadd.f32 0.0, %v765
        %v767 = vpop.f32.mrb[0].mxu0
        %v768 = vpop.f32.mrb[0].mxu0
        %v769 = vadd.f32 0.0, %v768
        %v770 = vpop.f32.mrb[0].mxu0
        %771 = vmatprep.mubr.bf16.mxu0 0
        %772 = vmatmul.mubr.bf16.gmra.mrb[0].mxu0 %v578
        %v773 = vpop.f32.mrb[0].mxu0
        %v774 = vadd.f32 0.0, %v773
        %v775 = vpop.f32.mrb[0].mxu0
        %v776 = vpop.f32.mrb[0].mxu0
        %v777 = vadd.f32 0.0, %v776
        %v778 = vpop.f32.mrb[0].mxu0
        %779 = vmatprep.mubr.bf16.mxu0 0
        %780 = vmatmul.mubr.bf16.gmra.mrb[0].mxu0 %v579
        %v781 = vpop.f32.mrb[0].mxu0
        %v782 = vadd.f32 0.0, %v781
        %v783 = vpop.f32.mrb[0].mxu0
        %v784 = vpop.f32.mrb[0].mxu0
        %v785 = vadd.f32 0.0, %v784
        %v786 = vpop.f32.mrb[0].mxu0
        %787 = vmatprep.mubr.bf16.mxu0 0
        %788 = vmatmul.mubr.bf16.gmra.mrb[0].mxu0 %v580
        %v789 = vpop.f32.mrb[0].mxu0
        %v790 = vadd.f32 0.0, %v789
        %v791 = vpop.f32.mrb[0].mxu0
        %v792 = vpop.f32.mrb[0].mxu0
        %v793 = vadd.f32 0.0, %v792
        %v794 = vpop.f32.mrb[0].mxu0
        %795 = vmatprep.mubr.bf16.mxu0 0
        %796 = vmatmul.mubr.bf16.gmra.mrb[0].mxu0 %v581
        %v797 = vpop.f32.mrb[0].mxu0
        %v798 = vadd.f32 0.0, %v797
        %v799 = vpop.f32.mrb[0].mxu0
        %v800 = vpop.f32.mrb[0].mxu0
        %v801 = vadd.f32 0.0, %v800
        %v802 = vpop.f32.mrb[0].mxu0
        %803 = vmatprep.mubr.bf16.mxu0 0
        %804 = vmatmul.mubr.bf16.gmra.mrb[0].mxu0 %v582
        %v805 = vpop.f32.mrb[0].mxu0
        %v806 = vadd.f32 0.0, %v805
        %v807 = vpop.f32.mrb[0].mxu0
        %v808 = vpop.f32.mrb[0].mxu0
        %v809 = vadd.f32 0.0, %v808
        %v810 = vpop.f32.mrb[0].mxu0
        %811 = vmatprep.mubr.bf16.mxu0 0
        %812 = vmatmul.mubr.bf16.gmra.mrb[0].mxu0 %v583
        %v813 = vpop.f32.mrb[0].mxu0
        %v814 = vadd.f32 0.0, %v813
        %v815 = vpop.f32.mrb[0].mxu0
        %v816 = vpop.f32.mrb[0].mxu0
        %v817 = vadd.f32 0.0, %v816
        %v818 = vpop.f32.mrb[0].mxu0
        %819 = vmatprep.mubr.bf16.mxu0 0
        %820 = vmatmul.mubr.bf16.gmra.mrb[0].mxu0 %v584
        %v821 = vpop.f32.mrb[0].mxu0
        %v822 = vadd.f32 0.0, %v821
        %v823 = vpop.f32.mrb[0].mxu0
        %v824 = vpop.f32.mrb[0].mxu0
        %v825 = vadd.f32 0.0, %v824
        %v826 = vpop.f32.mrb[0].mxu0
        %827 = vmatprep.mubr.bf16.mxu0 0
        %828 = vmatmul.mubr.bf16.gmra.mrb[0].mxu0 %v585
        %v829 = vpop.f32.mrb[0].mxu0
        %v830 = vadd.f32 0.0, %v829
        %v831 = vpop.f32.mrb[0].mxu0
        %v832 = vpop.f32.mrb[0].mxu0
        %v833 = vadd.f32 0.0, %v832
        %v834 = vpop.f32.mrb[0].mxu0
        %835 = vmatprep.mubr.bf16.mxu0 0
        %836 = vmatmul.mubr.bf16.gmra.mrb[0].mxu0 %v586
        %v837 = vpop.f32.mrb[0].mxu0
        %v838 = vadd.f32 0.0, %v837
        %v839 = vpop.f32.mrb[0].mxu0
        %v840 = vpop.f32.mrb[0].mxu0
        %v841 = vadd.f32 0.0, %v840
        %v842 = vpop.f32.mrb[0].mxu0
        %843 = vmatprep.mubr.bf16.mxu0 0
        %844 = vmatmul.mubr.bf16.gmra.mrb[0].mxu0 %v587
        %v845 = vpop.f32.mrb[0].mxu0
        %v846 = vadd.f32 0.0, %v845
        %v847 = vpop.f32.mrb[0].mxu0
        %v848 = vpop.f32.mrb[0].mxu0
        %v849 = vadd.f32 0.0, %v848
        %v850 = vpop.f32.mrb[0].mxu0
        %851 = vmatprep.mubr.bf16.mxu0 0
        %852 = vmatmul.mubr.bf16.gmra.mrb[0].mxu0 %v588
        %v853 = vpop.f32.mrb[0].mxu0
        %v854 = vadd.f32 0.0, %v853
        %v855 = vpop.f32.mrb[0].mxu0
        %v856 = vpop.f32.mrb[0].mxu0
        %v857 = vadd.f32 0.0, %v856
        %v858 = vpop.f32.mrb[0].mxu0
        %859 = vmatprep.mubr.bf16.mxu0 0
        %860 = vmatmul.mubr.bf16.gmra.mrb[0].mxu0 %v589
        %v861 = vpop.f32.mrb[0].mxu0
        %v862 = vadd.f32 0.0, %v861
        %v863 = vpop.f32.mrb[0].mxu0
        %v864 = vpop.f32.mrb[0].mxu0
        %v865 = vadd.f32 0.0, %v864
        %v866 = vpop.f32.mrb[0].mxu0
        %867 = vmatprep.mubr.bf16.mxu0 0
        %868 = vmatmul.mubr.bf16.gmra.mrb[0].mxu0 %v590
        %v869 = vpop.f32.mrb[0].mxu0
        %v870 = vadd.f32 0.0, %v869
        %v871 = vpop.f32.mrb[0].mxu0
        %v872 = vpop.f32.mrb[0].mxu0
        %v873 = vadd.f32 0.0, %v872
        %v874 = vpop.f32.mrb[0].mxu0
        %875 = vmatprep.mubr.bf16.mxu0 0
        %876 = vmatmul.mubr.bf16.gmra.mrb[0].mxu0 %v591
        %v877 = vpop.f32.mrb[0].mxu0
        %v878 = vadd.f32 0.0, %v877
        %v879 = vpop.f32.mrb[0].mxu0
        %v880 = vpop.f32.mrb[0].mxu0
        %v881 = vadd.f32 0.0, %v880
        %v882 = vpop.f32.mrb[0].mxu0
        %883 = vmatprep.mubr.bf16.mxu0 0
        %884 = vmatmul.mubr.bf16.gmra.mrb[0].mxu0 %v592
        %v885 = vpop.f32.mrb[0].mxu0
        %v886 = vadd.f32 0.0, %v885
        %v887 = vpop.f32.mrb[0].mxu0
        %v888 = vpop.f32.mrb[0].mxu0
        %v889 = vadd.f32 0.0, %v888
        %v890 = vpop.f32.mrb[0].mxu0
        %891 = vmatprep.mubr.bf16.mxu0 0
        %892 = vmatmul.mubr.bf16.gmra.mrb[0].mxu0 %v593
        %v893 = vpop.f32.mrb[0].mxu0
        %v894 = vadd.f32 0.0, %v893
        %v895 = vpop.f32.mrb[0].mxu0
        %v896 = vpop.f32.mrb[0].mxu0
        %v897 = vadd.f32 0.0, %v896
        %v898 = vpop.f32.mrb[0].mxu0
        %899 = vmatprep.mubr.bf16.mxu0 0
        %900 = vmatmul.mubr.bf16.gmra.mrb[0].mxu0 %v594
        %v901 = vpop.f32.mrb[0].mxu0
        %v902 = vadd.f32 0.0, %v901
        %v903 = vpop.f32.mrb[0].mxu0
        %v904 = vpop.f32.mrb[0].mxu0
        %v905 = vadd.f32 0.0, %v904
        %v906 = vpop.f32.mrb[0].mxu0
        %907 = vmatprep.mubr.bf16.mxu0 0
        %908 = vmatmul.mubr.bf16.gmra.mrb[0].mxu0 %v595
        %v909 = vpop.f32.mrb[0].mxu0
        %v910 = vadd.f32 0.0, %v909
        %v911 = vpop.f32.mrb[0].mxu0
        %v912 = vpop.f32.mrb[0].mxu0
        %v913 = vadd.f32 0.0, %v912
        %v914 = vpop.f32.mrb[0].mxu0
        %915 = vmatprep.mubr.bf16.mxu0 0
        %916 = vmatmul.mubr.bf16.gmra.mrb[0].mxu0 %v596
        %v917 = vpop.f32.mrb[0].mxu0
        %v918 = vadd.f32 0.0, %v917
        %v919 = vpop.f32.mrb[0].mxu0
        %v920 = vpop.f32.mrb[0].mxu0
        %v921 = vadd.f32 0.0, %v920
        %v922 = vpop.f32.mrb[0].mxu0
        %923 = vmatprep.mubr.bf16.mxu0 0
        %924 = vmatmul.mubr.bf16.gmra.mrb[0].mxu0 %v597
        %v925 = vpop.f32.mrb[0].mxu0
        %v926 = vadd.f32 0.0, %v925
        %v927 = vpop.f32.mrb[0].mxu0
        %v928 = vpop.f32.mrb[0].mxu0
        %v929 = vadd.f32 0.0, %v928
        %v930 = vpop.f32.mrb[0].mxu0
        %931 = vmatprep.mubr.bf16.mxu0 0
        %932 = vmatmul.mubr.bf16.gmra.mrb[0].mxu0 %v598
        %v933 = vpop.f32.mrb[0].mxu0
        %v934 = vadd.f32 0.0, %v933
        %v935 = vpop.f32.mrb[0].mxu0
        %v936 = vpop.f32.mrb[0].mxu0
        %v937 = vadd.f32 0.0, %v936
        %v938 = vpop.f32.mrb[0].mxu0
        %939 = vmatprep.mubr.bf16.mxu0 0
        %940 = vmatmul.mubr.bf16.gmra.mrb[0].mxu0 %v599
        %v941 = vpop.f32.mrb[0].mxu0
        %v942 = vadd.f32 0.0, %v941
        %v943 = vpop.f32.mrb[0].mxu0
        %v944 = vpop.f32.mrb[0].mxu0
        %v945 = vadd.f32 0.0, %v944
        %v946 = vpop.f32.mrb[0].mxu0
        %947 = vmatprep.mubr.bf16.mxu0 0
        %948 = vmatmul.mubr.bf16.gmra.mrb[0].mxu0 %v600
        %v949 = vpop.f32.mrb[0].mxu0
        %v950 = vadd.f32 0.0, %v949
        %v951 = vpop.f32.mrb[0].mxu0
        %v952 = vpop.f32.mrb[0].mxu0
        %v953 = vadd.f32 0.0, %v952
        %v954 = vpop.f32.mrb[0].mxu0
        %955 = vmatprep.mubr.bf16.mxu0 0
        %956 = vmatmul.mubr.bf16.gmra.mrb[0].mxu0 %v601
        %v957 = vpop.f32.mrb[0].mxu0
        %v958 = vadd.f32 0.0, %v957
        %v959 = vpop.f32.mrb[0].mxu0
        %v960 = vpop.f32.mrb[0].mxu0
        %v961 = vadd.f32 0.0, %v960
        %v962 = vpop.f32.mrb[0].mxu0
        %963 = vmatprep.mubr.bf16.mxu0 0
        %964 = vmatmul.mubr.bf16.gmra.mrb[0].mxu0 %v602
        %v965 = vpop.f32.mrb[0].mxu0
        %v966 = vadd.f32 0.0, %v965
        %v967 = vpop.f32.mrb[0].mxu0
        %v968 = vpop.f32.mrb[0].mxu0
        %v969 = vadd.f32 0.0, %v968
        %v970 = vpop.f32.mrb[0].mxu0
        %971 = vdwg.mxu0
        %v972 = vadd.f32 %v299, %v718
        %v973 = vadd.f32 %v300, %v721
        %v974 = vadd.f32 %v301, %v726
        %v975 = vadd.f32 %v302, %v729
        %v976 = vadd.f32 %v303, %v734
        %v977 = vadd.f32 %v304, %v737
        %v978 = vadd.f32 %v305, %v742
        %v979 = vadd.f32 %v306, %v745
        %v980 = vadd.f32 %v307, %v750
        %v981 = vadd.f32 %v308, %v753
        %v982 = vadd.f32 %v309, %v758
        %v983 = vadd.f32 %v310, %v761
        %v984 = vadd.f32 %v311, %v766
        %v985 = vadd.f32 %v312, %v769
        %v986 = vadd.f32 %v313, %v774
        %v987 = vadd.f32 %v314, %v777
        %v988 = vadd.f32 %v315, %v782
        %v989 = vadd.f32 %v316, %v785
        %v990 = vadd.f32 %v317, %v790
        %v991 = vadd.f32 %v318, %v793
        %v992 = vadd.f32 %v319, %v798
        %v993 = vadd.f32 %v320, %v801
        %v994 = vadd.f32 %v321, %v806
        %v995 = vadd.f32 %v322, %v809
        %v996 = vadd.f32 %v323, %v814
        %v997 = vadd.f32 %v324, %v817
        %v998 = vadd.f32 %v325, %v822
        %v999 = vadd.f32 %v326, %v825
        %v1000 = vadd.f32 %v327, %v830
        %v1001 = vadd.f32 %v328, %v833
        %v1002 = vadd.f32 %v329, %v838
        %v1003 = vadd.f32 %v330, %v841
        %v1004 = vadd.f32 %v331, %v846
        %v1005 = vadd.f32 %v332, %v849
        %v1006 = vadd.f32 %v333, %v854
        %v1007 = vadd.f32 %v334, %v857
        %v1008 = vadd.f32 %v335, %v862
        %v1009 = vadd.f32 %v336, %v865
        %v1010 = vadd.f32 %v337, %v870
        %v1011 = vadd.f32 %v338, %v873
        %v1012 = vadd.f32 %v339, %v878
        %v1013 = vadd.f32 %v340, %v881
        %v1014 = vadd.f32 %v341, %v886
        %v1015 = vadd.f32 %v342, %v889
        %v1016 = vadd.f32 %v343, %v894
        %v1017 = vadd.f32 %v344, %v897
        %v1018 = vadd.f32 %v345, %v902
        %v1019 = vadd.f32 %v346, %v905
        %v1020 = vadd.f32 %v347, %v910
        %v1021 = vadd.f32 %v348, %v913
        %v1022 = vadd.f32 %v349, %v918
        %v1023 = vadd.f32 %v350, %v921
        %v1024 = vadd.f32 %v351, %v926
        %v1025 = vadd.f32 %v352, %v929
        %v1026 = vadd.f32 %v353, %v934
        %v1027 = vadd.f32 %v354, %v937
        %v1028 = vadd.f32 %v355, %v942
        %v1029 = vadd.f32 %v356, %v945
        %v1030 = vadd.f32 %v357, %v950
        %v1031 = vadd.f32 %v358, %v953
        %v1032 = vadd.f32 %v359, %v958
        %v1033 = vadd.f32 %v360, %v961
        %v1034 = vadd.f32 %v361, %v966
        %v1035 = vadd.f32 %v362, %v969
        %1036 = vst [vmem:[#allocation2] sm:$0xff] %v972
        %1037 = vst [vmem:[#allocation2 + $0x8] sm:$0xff] %v973
        %1038 = vst [vmem:[#allocation2 + $0x10] sm:$0xff] %v974
        %1039 = vst [vmem:[#allocation2 + $0x18] sm:$0xff] %v975
        %1040 = vst [vmem:[#allocation2 + $0x20] sm:$0xff] %v976
        %1041 = vst [vmem:[#allocation2 + $0x28] sm:$0xff] %v977
        %1042 = vst [vmem:[#allocation2 + $0x30] sm:$0xff] %v978
        %1043 = vst [vmem:[#allocation2 + $0x38] sm:$0xff] %v979
        %1044 = vst [vmem:[#allocation2 + $0x40] sm:$0xff] %v980
        %1045 = vst [vmem:[#allocation2 + $0x48] sm:$0xff] %v981
        %1046 = vst [vmem:[#allocation2 + $0x50] sm:$0xff] %v982
        %1047 = vst [vmem:[#allocation2 + $0x58] sm:$0xff] %v983
        %1048 = vst [vmem:[#allocation2 + $0x60] sm:$0xff] %v984
        %1049 = vst [vmem:[#allocation2 + $0x68] sm:$0xff] %v985
        %1050 = vst [vmem:[#allocation2 + $0x70] sm:$0xff] %v986
        %1051 = vst [vmem:[#allocation2 + $0x78] sm:$0xff] %v987
        %1052 = vst [vmem:[#allocation2 + $0x80] sm:$0xff] %v988
        %1053 = vst [vmem:[#allocation2 + $0x88] sm:$0xff] %v989
        %1054 = vst [vmem:[#allocation2 + $0x90] sm:$0xff] %v990
        %1055 = vst [vmem:[#allocation2 + $0x98] sm:$0xff] %v991
        %1056 = vst [vmem:[#allocation2 + $0xa0] sm:$0xff] %v992
        %1057 = vst [vmem:[#allocation2 + $0xa8] sm:$0xff] %v993
        %1058 = vst [vmem:[#allocation2 + $0xb0] sm:$0xff] %v994
        %1059 = vst [vmem:[#allocation2 + $0xb8] sm:$0xff] %v995
        %1060 = vst [vmem:[#allocation2 + $0xc0] sm:$0xff] %v996
        %1061 = vst [vmem:[#allocation2 + $0xc8] sm:$0xff] %v997
        %1062 = vst [vmem:[#allocation2 + $0xd0] sm:$0xff] %v998
        %1063 = vst [vmem:[#allocation2 + $0xd8] sm:$0xff] %v999
        %1064 = vst [vmem:[#allocation2 + $0xe0] sm:$0xff] %v1000
        %1065 = vst [vmem:[#allocation2 + $0xe8] sm:$0xff] %v1001
        %1066 = vst [vmem:[#allocation2 + $0xf0] sm:$0xff] %v1002
        %1067 = vst [vmem:[#allocation2 + $0xf8] sm:$0xff] %v1003
        %1068 = vst [vmem:[#allocation2 + $0x100] sm:$0xff] %v1004
        %1069 = vst [vmem:[#allocation2 + $0x108] sm:$0xff] %v1005
        %1070 = vst [vmem:[#allocation2 + $0x110] sm:$0xff] %v1006
        %1071 = vst [vmem:[#allocation2 + $0x118] sm:$0xff] %v1007
        %1072 = vst [vmem:[#allocation2 + $0x120] sm:$0xff] %v1008
        %1073 = vst [vmem:[#allocation2 + $0x128] sm:$0xff] %v1009
        %1074 = vst [vmem:[#allocation2 + $0x130] sm:$0xff] %v1010
        %1075 = vst [vmem:[#allocation2 + $0x138] sm:$0xff] %v1011
        %1076 = vst [vmem:[#allocation2 + $0x140] sm:$0xff] %v1012
        %1077 = vst [vmem:[#allocation2 + $0x148] sm:$0xff] %v1013
        %1078 = vst [vmem:[#allocation2 + $0x150] sm:$0xff] %v1014
        %1079 = vst [vmem:[#allocation2 + $0x158] sm:$0xff] %v1015
        %1080 = vst [vmem:[#allocation2 + $0x160] sm:$0xff] %v1016
        %1081 = vst [vmem:[#allocation2 + $0x168] sm:$0xff] %v1017
        %1082 = vst [vmem:[#allocation2 + $0x170] sm:$0xff] %v1018
        %1083 = vst [vmem:[#allocation2 + $0x178] sm:$0xff] %v1019
        %1084 = vst [vmem:[#allocation2 + $0x180] sm:$0xff] %v1020
        %1085 = vst [vmem:[#allocation2 + $0x188] sm:$0xff] %v1021
        %1086 = vst [vmem:[#allocation2 + $0x190] sm:$0xff] %v1022
        %1087 = vst [vmem:[#allocation2 + $0x198] sm:$0xff] %v1023
        %1088 = vst [vmem:[#allocation2 + $0x1a0] sm:$0xff] %v1024
        %1089 = vst [vmem:[#allocation2 + $0x1a8] sm:$0xff] %v1025
        %1090 = vst [vmem:[#allocation2 + $0x1b0] sm:$0xff] %v1026
        %1091 = vst [vmem:[#allocation2 + $0x1b8] sm:$0xff] %v1027
        %1092 = vst [vmem:[#allocation2 + $0x1c0] sm:$0xff] %v1028
        %1093 = vst [vmem:[#allocation2 + $0x1c8] sm:$0xff] %v1029
        %1094 = vst [vmem:[#allocation2 + $0x1d0] sm:$0xff] %v1030
        %1095 = vst [vmem:[#allocation2 + $0x1d8] sm:$0xff] %v1031
        %1096 = vst [vmem:[#allocation2 + $0x1e0] sm:$0xff] %v1032
        %1097 = vst [vmem:[#allocation2 + $0x1e8] sm:$0xff] %v1033
        %1098 = vst [vmem:[#allocation2 + $0x1f0] sm:$0xff] %v1034
        %1099 = vst [vmem:[#allocation2 + $0x1f8] sm:$0xff] %v1035
        // Predicated region
        $region45: #{tpu_custom_call.1} parent=31 // pred_check
          %p1100 = pneg %p231
        $region46: #{tpu_custom_call.1} parent=31 // pred_check_branch
          %1102 = sbr.rel (%p1100) target = $region48
        $region47: #{tpu_custom_call.1} parent=31 // pred_region
          %v1103 = vld [vmem:[#allocation2] sm:$0xff]
          %v1104 = vld [vmem:[#allocation2 + $0x8] sm:$0xff]
          %v1105 = vld [vmem:[#allocation2 + $0x10] sm:$0xff]
          %v1106 = vld [vmem:[#allocation2 + $0x18] sm:$0xff]
          %v1107 = vld [vmem:[#allocation2 + $0x20] sm:$0xff]
          %v1108 = vld [vmem:[#allocation2 + $0x28] sm:$0xff]
          %v1109 = vld [vmem:[#allocation2 + $0x30] sm:$0xff]
          %v1110 = vld [vmem:[#allocation2 + $0x38] sm:$0xff]
          %v1111 = vld [vmem:[#allocation2 + $0x40] sm:$0xff]
          %v1112 = vld [vmem:[#allocation2 + $0x48] sm:$0xff]
          %v1113 = vld [vmem:[#allocation2 + $0x50] sm:$0xff]
          %v1114 = vld [vmem:[#allocation2 + $0x58] sm:$0xff]
          %v1115 = vld [vmem:[#allocation2 + $0x60] sm:$0xff]
          %v1116 = vld [vmem:[#allocation2 + $0x68] sm:$0xff]
          %v1117 = vld [vmem:[#allocation2 + $0x70] sm:$0xff]
          %v1118 = vld [vmem:[#allocation2 + $0x78] sm:$0xff]
          %v1119 = vld [vmem:[#allocation2 + $0x80] sm:$0xff]
          %v1120 = vld [vmem:[#allocation2 + $0x88] sm:$0xff]
          %v1121 = vld [vmem:[#allocation2 + $0x90] sm:$0xff]
          %v1122 = vld [vmem:[#allocation2 + $0x98] sm:$0xff]
          %v1123 = vld [vmem:[#allocation2 + $0xa0] sm:$0xff]
          %v1124 = vld [vmem:[#allocation2 + $0xa8] sm:$0xff]
          %v1125 = vld [vmem:[#allocation2 + $0xb0] sm:$0xff]
          %v1126 = vld [vmem:[#allocation2 + $0xb8] sm:$0xff]
          %v1127 = vld [vmem:[#allocation2 + $0xc0] sm:$0xff]
          %v1128 = vld [vmem:[#allocation2 + $0xc8] sm:$0xff]
          %v1129 = vld [vmem:[#allocation2 + $0xd0] sm:$0xff]
          %v1130 = vld [vmem:[#allocation2 + $0xd8] sm:$0xff]
          %v1131 = vld [vmem:[#allocation2 + $0xe0] sm:$0xff]
          %v1132 = vld [vmem:[#allocation2 + $0xe8] sm:$0xff]
          %v1133 = vld [vmem:[#allocation2 + $0xf0] sm:$0xff]
          %v1134 = vld [vmem:[#allocation2 + $0xf8] sm:$0xff]
          %v1135 = vld [vmem:[#allocation2 + $0x100] sm:$0xff]
          %v1136 = vld [vmem:[#allocation2 + $0x108] sm:$0xff]
          %v1137 = vld [vmem:[#allocation2 + $0x110] sm:$0xff]
          %v1138 = vld [vmem:[#allocation2 + $0x118] sm:$0xff]
          %v1139 = vld [vmem:[#allocation2 + $0x120] sm:$0xff]
          %v1140 = vld [vmem:[#allocation2 + $0x128] sm:$0xff]
          %v1141 = vld [vmem:[#allocation2 + $0x130] sm:$0xff]
          %v1142 = vld [vmem:[#allocation2 + $0x138] sm:$0xff]
          %v1143 = vld [vmem:[#allocation2 + $0x140] sm:$0xff]
          %v1144 = vld [vmem:[#allocation2 + $0x148] sm:$0xff]
          %v1145 = vld [vmem:[#allocation2 + $0x150] sm:$0xff]
          %v1146 = vld [vmem:[#allocation2 + $0x158] sm:$0xff]
          %v1147 = vld [vmem:[#allocation2 + $0x160] sm:$0xff]
          %v1148 = vld [vmem:[#allocation2 + $0x168] sm:$0xff]
          %v1149 = vld [vmem:[#allocation2 + $0x170] sm:$0xff]
          %v1150 = vld [vmem:[#allocation2 + $0x178] sm:$0xff]
          %v1151 = vld [vmem:[#allocation2 + $0x180] sm:$0xff]
          %v1152 = vld [vmem:[#allocation2 + $0x188] sm:$0xff]
          %v1153 = vld [vmem:[#allocation2 + $0x190] sm:$0xff]
          %v1154 = vld [vmem:[#allocation2 + $0x198] sm:$0xff]
          %v1155 = vld [vmem:[#allocation2 + $0x1a0] sm:$0xff]
          %v1156 = vld [vmem:[#allocation2 + $0x1a8] sm:$0xff]
          %v1157 = vld [vmem:[#allocation2 + $0x1b0] sm:$0xff]
          %v1158 = vld [vmem:[#allocation2 + $0x1b8] sm:$0xff]
          %v1159 = vld [vmem:[#allocation2 + $0x1c0] sm:$0xff]
          %v1160 = vld [vmem:[#allocation2 + $0x1c8] sm:$0xff]
          %v1161 = vld [vmem:[#allocation2 + $0x1d0] sm:$0xff]
          %v1162 = vld [vmem:[#allocation2 + $0x1d8] sm:$0xff]
          %v1163 = vld [vmem:[#allocation2 + $0x1e0] sm:$0xff]
          %v1164 = vld [vmem:[#allocation2 + $0x1e8] sm:$0xff]
          %v1165 = vld [vmem:[#allocation2 + $0x1f0] sm:$0xff]
          %v1166 = vld [vmem:[#allocation2 + $0x1f8] sm:$0xff]
          %v1167 = vld [vmem:[%s2] sm:$0x1]
          %v1169 = vlaneseq
          %v1170 = vshrl.u32 %v1169, 7
          %v1171 = vsub.s32 0, %v1170
          %v1172 = vrot.slane %v1167, %v1171
          %v1174 = vadd.f32 %v1103, %v1172
          %v1175 = vadd.f32 %v1104, %v1172
          %v1176 = vadd.f32 %v1105, %v1172
          %v1177 = vadd.f32 %v1106, %v1172
          %v1178 = vadd.f32 %v1107, %v1172
          %v1179 = vadd.f32 %v1108, %v1172
          %v1180 = vadd.f32 %v1109, %v1172
          %v1181 = vadd.f32 %v1110, %v1172
          %v1182 = vadd.f32 %v1111, %v1172
          %v1183 = vadd.f32 %v1112, %v1172
          %v1184 = vadd.f32 %v1113, %v1172
          %v1185 = vadd.f32 %v1114, %v1172
          %v1186 = vadd.f32 %v1115, %v1172
          %v1187 = vadd.f32 %v1116, %v1172
          %v1188 = vadd.f32 %v1117, %v1172
          %v1189 = vadd.f32 %v1118, %v1172
          %v1190 = vadd.f32 %v1119, %v1172
          %v1191 = vadd.f32 %v1120, %v1172
          %v1192 = vadd.f32 %v1121, %v1172
          %v1193 = vadd.f32 %v1122, %v1172
          %v1194 = vadd.f32 %v1123, %v1172
          %v1195 = vadd.f32 %v1124, %v1172
          %v1196 = vadd.f32 %v1125, %v1172
          %v1197 = vadd.f32 %v1126, %v1172
          %v1198 = vadd.f32 %v1127, %v1172
          %v1199 = vadd.f32 %v1128, %v1172
          %v1200 = vadd.f32 %v1129, %v1172
          %v1201 = vadd.f32 %v1130, %v1172
          %v1202 = vadd.f32 %v1131, %v1172
          %v1203 = vadd.f32 %v1132, %v1172
          %v1204 = vadd.f32 %v1133, %v1172
          %v1205 = vadd.f32 %v1134, %v1172
          %v1206 = vadd.f32 %v1135, %v1172
          %v1207 = vadd.f32 %v1136, %v1172
          %v1208 = vadd.f32 %v1137, %v1172
          %v1209 = vadd.f32 %v1138, %v1172
          %v1210 = vadd.f32 %v1139, %v1172
          %v1211 = vadd.f32 %v1140, %v1172
          %v1212 = vadd.f32 %v1141, %v1172
          %v1213 = vadd.f32 %v1142, %v1172
          %v1214 = vadd.f32 %v1143, %v1172
          %v1215 = vadd.f32 %v1144, %v1172
          %v1216 = vadd.f32 %v1145, %v1172
          %v1217 = vadd.f32 %v1146, %v1172
          %v1218 = vadd.f32 %v1147, %v1172
          %v1219 = vadd.f32 %v1148, %v1172
          %v1220 = vadd.f32 %v1149, %v1172
          %v1221 = vadd.f32 %v1150, %v1172
          %v1222 = vadd.f32 %v1151, %v1172
          %v1223 = vadd.f32 %v1152, %v1172
          %v1224 = vadd.f32 %v1153, %v1172
          %v1225 = vadd.f32 %v1154, %v1172
          %v1226 = vadd.f32 %v1155, %v1172
          %v1227 = vadd.f32 %v1156, %v1172
          %v1228 = vadd.f32 %v1157, %v1172
          %v1229 = vadd.f32 %v1158, %v1172
          %v1230 = vadd.f32 %v1159, %v1172
          %v1231 = vadd.f32 %v1160, %v1172
          %v1232 = vadd.f32 %v1161, %v1172
          %v1233 = vadd.f32 %v1162, %v1172
          %v1234 = vadd.f32 %v1163, %v1172
          %v1235 = vadd.f32 %v1164, %v1172
          %v1236 = vadd.f32 %v1165, %v1172
          %v1237 = vadd.f32 %v1166, %v1172
          %vm1238 = vcmp.gt.f32.partialorder %v1174, 0.0
          %vm1239 = vcmp.gt.f32.partialorder %v1175, 0.0
          %vm1240 = vcmp.gt.f32.partialorder %v1176, 0.0
          %vm1241 = vcmp.gt.f32.partialorder %v1177, 0.0
          %vm1242 = vcmp.gt.f32.partialorder %v1178, 0.0
          %vm1243 = vcmp.gt.f32.partialorder %v1179, 0.0
          %vm1244 = vcmp.gt.f32.partialorder %v1180, 0.0
          %vm1245 = vcmp.gt.f32.partialorder %v1181, 0.0
          %vm1246 = vcmp.gt.f32.partialorder %v1182, 0.0
          %vm1247 = vcmp.gt.f32.partialorder %v1183, 0.0
          %vm1248 = vcmp.gt.f32.partialorder %v1184, 0.0
          %vm1249 = vcmp.gt.f32.partialorder %v1185, 0.0
          %vm1250 = vcmp.gt.f32.partialorder %v1186, 0.0
          %vm1251 = vcmp.gt.f32.partialorder %v1187, 0.0
          %vm1252 = vcmp.gt.f32.partialorder %v1188, 0.0
          %vm1253 = vcmp.gt.f32.partialorder %v1189, 0.0
          %vm1254 = vcmp.gt.f32.partialorder %v1190, 0.0
          %vm1255 = vcmp.gt.f32.partialorder %v1191, 0.0
          %vm1256 = vcmp.gt.f32.partialorder %v1192, 0.0
          %vm1257 = vcmp.gt.f32.partialorder %v1193, 0.0
          %vm1258 = vcmp.gt.f32.partialorder %v1194, 0.0
          %vm1259 = vcmp.gt.f32.partialorder %v1195, 0.0
          %vm1260 = vcmp.gt.f32.partialorder %v1196, 0.0
          %vm1261 = vcmp.gt.f32.partialorder %v1197, 0.0
          %vm1262 = vcmp.gt.f32.partialorder %v1198, 0.0
          %vm1263 = vcmp.gt.f32.partialorder %v1199, 0.0
          %vm1264 = vcmp.gt.f32.partialorder %v1200, 0.0
          %vm1265 = vcmp.gt.f32.partialorder %v1201, 0.0
          %vm1266 = vcmp.gt.f32.partialorder %v1202, 0.0
          %vm1267 = vcmp.gt.f32.partialorder %v1203, 0.0
          %vm1268 = vcmp.gt.f32.partialorder %v1204, 0.0
          %vm1269 = vcmp.gt.f32.partialorder %v1205, 0.0
          %vm1270 = vcmp.gt.f32.partialorder %v1206, 0.0
          %vm1271 = vcmp.gt.f32.partialorder %v1207, 0.0
          %vm1272 = vcmp.gt.f32.partialorder %v1208, 0.0
          %vm1273 = vcmp.gt.f32.partialorder %v1209, 0.0
          %vm1274 = vcmp.gt.f32.partialorder %v1210, 0.0
          %vm1275 = vcmp.gt.f32.partialorder %v1211, 0.0
          %vm1276 = vcmp.gt.f32.partialorder %v1212, 0.0
          %vm1277 = vcmp.gt.f32.partialorder %v1213, 0.0
          %vm1278 = vcmp.gt.f32.partialorder %v1214, 0.0
          %vm1279 = vcmp.gt.f32.partialorder %v1215, 0.0
          %vm1280 = vcmp.gt.f32.partialorder %v1216, 0.0
          %vm1281 = vcmp.gt.f32.partialorder %v1217, 0.0
          %vm1282 = vcmp.gt.f32.partialorder %v1218, 0.0
          %vm1283 = vcmp.gt.f32.partialorder %v1219, 0.0
          %vm1284 = vcmp.gt.f32.partialorder %v1220, 0.0
          %vm1285 = vcmp.gt.f32.partialorder %v1221, 0.0
          %vm1286 = vcmp.gt.f32.partialorder %v1222, 0.0
          %vm1287 = vcmp.gt.f32.partialorder %v1223, 0.0
          %vm1288 = vcmp.gt.f32.partialorder %v1224, 0.0
          %vm1289 = vcmp.gt.f32.partialorder %v1225, 0.0
          %vm1290 = vcmp.gt.f32.partialorder %v1226, 0.0
          %vm1291 = vcmp.gt.f32.partialorder %v1227, 0.0
          %vm1292 = vcmp.gt.f32.partialorder %v1228, 0.0
          %vm1293 = vcmp.gt.f32.partialorder %v1229, 0.0
          %vm1294 = vcmp.gt.f32.partialorder %v1230, 0.0
          %vm1295 = vcmp.gt.f32.partialorder %v1231, 0.0
          %vm1296 = vcmp.gt.f32.partialorder %v1232, 0.0
          %vm1297 = vcmp.gt.f32.partialorder %v1233, 0.0
          %vm1298 = vcmp.gt.f32.partialorder %v1234, 0.0
          %vm1299 = vcmp.gt.f32.partialorder %v1235, 0.0
          %vm1300 = vcmp.gt.f32.partialorder %v1236, 0.0
          %vm1301 = vcmp.gt.f32.partialorder %v1237, 0.0
          %v1302 = vmul.f32 %v1174, 0.2
          %v1303 = vmul.f32 %v1175, 0.2
          %v1304 = vmul.f32 %v1176, 0.2
          %v1305 = vmul.f32 %v1177, 0.2
          %v1306 = vmul.f32 %v1178, 0.2
          %v1307 = vmul.f32 %v1179, 0.2
          %v1308 = vmul.f32 %v1180, 0.2
          %v1309 = vmul.f32 %v1181, 0.2
          %v1310 = vmul.f32 %v1182, 0.2
          %v1311 = vmul.f32 %v1183, 0.2
          %v1312 = vmul.f32 %v1184, 0.2
          %v1313 = vmul.f32 %v1185, 0.2
          %v1314 = vmul.f32 %v1186, 0.2
          %v1315 = vmul.f32 %v1187, 0.2
          %v1316 = vmul.f32 %v1188, 0.2
          %v1317 = vmul.f32 %v1189, 0.2
          %v1318 = vmul.f32 %v1190, 0.2
          %v1319 = vmul.f32 %v1191, 0.2
          %v1320 = vmul.f32 %v1192, 0.2
          %v1321 = vmul.f32 %v1193, 0.2
          %v1322 = vmul.f32 %v1194, 0.2
          %v1323 = vmul.f32 %v1195, 0.2
          %v1324 = vmul.f32 %v1196, 0.2
          %v1325 = vmul.f32 %v1197, 0.2
          %v1326 = vmul.f32 %v1198, 0.2
          %v1327 = vmul.f32 %v1199, 0.2
          %v1328 = vmul.f32 %v1200, 0.2
          %v1329 = vmul.f32 %v1201, 0.2
          %v1330 = vmul.f32 %v1202, 0.2
          %v1331 = vmul.f32 %v1203, 0.2
          %v1332 = vmul.f32 %v1204, 0.2
          %v1333 = vmul.f32 %v1205, 0.2
          %v1334 = vmul.f32 %v1206, 0.2
          %v1335 = vmul.f32 %v1207, 0.2
          %v1336 = vmul.f32 %v1208, 0.2
          %v1337 = vmul.f32 %v1209, 0.2
          %v1338 = vmul.f32 %v1210, 0.2
          %v1339 = vmul.f32 %v1211, 0.2
          %v1340 = vmul.f32 %v1212, 0.2
          %v1341 = vmul.f32 %v1213, 0.2
          %v1342 = vmul.f32 %v1214, 0.2
          %v1343 = vmul.f32 %v1215, 0.2
          %v1344 = vmul.f32 %v1216, 0.2
          %v1345 = vmul.f32 %v1217, 0.2
          %v1346 = vmul.f32 %v1218, 0.2
          %v1347 = vmul.f32 %v1219, 0.2
          %v1348 = vmul.f32 %v1220, 0.2
          %v1349 = vmul.f32 %v1221, 0.2
          %v1350 = vmul.f32 %v1222, 0.2
          %v1351 = vmul.f32 %v1223, 0.2
          %v1352 = vmul.f32 %v1224, 0.2
          %v1353 = vmul.f32 %v1225, 0.2
          %v1354 = vmul.f32 %v1226, 0.2
          %v1355 = vmul.f32 %v1227, 0.2
          %v1356 = vmul.f32 %v1228, 0.2
          %v1357 = vmul.f32 %v1229, 0.2
          %v1358 = vmul.f32 %v1230, 0.2
          %v1359 = vmul.f32 %v1231, 0.2
          %v1360 = vmul.f32 %v1232, 0.2
          %v1361 = vmul.f32 %v1233, 0.2
          %v1362 = vmul.f32 %v1234, 0.2
          %v1363 = vmul.f32 %v1235, 0.2
          %v1364 = vmul.f32 %v1236, 0.2
          %v1365 = vmul.f32 %v1237, 0.2
          %v1366 = vsel %vm1238, %v1174, %v1302
          %v1367 = vsel %vm1239, %v1175, %v1303
          %v1368 = vsel %vm1240, %v1176, %v1304
          %v1369 = vsel %vm1241, %v1177, %v1305
          %v1370 = vsel %vm1242, %v1178, %v1306
          %v1371 = vsel %vm1243, %v1179, %v1307
          %v1372 = vsel %vm1244, %v1180, %v1308
          %v1373 = vsel %vm1245, %v1181, %v1309
          %v1374 = vsel %vm1246, %v1182, %v1310
          %v1375 = vsel %vm1247, %v1183, %v1311
          %v1376 = vsel %vm1248, %v1184, %v1312
          %v1377 = vsel %vm1249, %v1185, %v1313
          %v1378 = vsel %vm1250, %v1186, %v1314
          %v1379 = vsel %vm1251, %v1187, %v1315
          %v1380 = vsel %vm1252, %v1188, %v1316
          %v1381 = vsel %vm1253, %v1189, %v1317
          %v1382 = vsel %vm1254, %v1190, %v1318
          %v1383 = vsel %vm1255, %v1191, %v1319
          %v1384 = vsel %vm1256, %v1192, %v1320
          %v1385 = vsel %vm1257, %v1193, %v1321
          %v1386 = vsel %vm1258, %v1194, %v1322
          %v1387 = vsel %vm1259, %v1195, %v1323
          %v1388 = vsel %vm1260, %v1196, %v1324
          %v1389 = vsel %vm1261, %v1197, %v1325
          %v1390 = vsel %vm1262, %v1198, %v1326
          %v1391 = vsel %vm1263, %v1199, %v1327
          %v1392 = vsel %vm1264, %v1200, %v1328
          %v1393 = vsel %vm1265, %v1201, %v1329
          %v1394 = vsel %vm1266, %v1202, %v1330
          %v1395 = vsel %vm1267, %v1203, %v1331
          %v1396 = vsel %vm1268, %v1204, %v1332
          %v1397 = vsel %vm1269, %v1205, %v1333
          %v1398 = vsel %vm1270, %v1206, %v1334
          %v1399 = vsel %vm1271, %v1207, %v1335
          %v1400 = vsel %vm1272, %v1208, %v1336
          %v1401 = vsel %vm1273, %v1209, %v1337
          %v1402 = vsel %vm1274, %v1210, %v1338
          %v1403 = vsel %vm1275, %v1211, %v1339
          %v1404 = vsel %vm1276, %v1212, %v1340
          %v1405 = vsel %vm1277, %v1213, %v1341
          %v1406 = vsel %vm1278, %v1214, %v1342
          %v1407 = vsel %vm1279, %v1215, %v1343
          %v1408 = vsel %vm1280, %v1216, %v1344
          %v1409 = vsel %vm1281, %v1217, %v1345
          %v1410 = vsel %vm1282, %v1218, %v1346
          %v1411 = vsel %vm1283, %v1219, %v1347
          %v1412 = vsel %vm1284, %v1220, %v1348
          %v1413 = vsel %vm1285, %v1221, %v1349
          %v1414 = vsel %vm1286, %v1222, %v1350
          %v1415 = vsel %vm1287, %v1223, %v1351
          %v1416 = vsel %vm1288, %v1224, %v1352
          %v1417 = vsel %vm1289, %v1225, %v1353
          %v1418 = vsel %vm1290, %v1226, %v1354
          %v1419 = vsel %vm1291, %v1227, %v1355
          %v1420 = vsel %vm1292, %v1228, %v1356
          %v1421 = vsel %vm1293, %v1229, %v1357
          %v1422 = vsel %vm1294, %v1230, %v1358
          %v1423 = vsel %vm1295, %v1231, %v1359
          %v1424 = vsel %vm1296, %v1232, %v1360
          %v1425 = vsel %vm1297, %v1233, %v1361
          %v1426 = vsel %vm1298, %v1234, %v1362
          %v1427 = vsel %vm1299, %v1235, %v1363
          %v1428 = vsel %vm1300, %v1236, %v1364
          %v1429 = vsel %vm1301, %v1237, %v1365
          %v1430 = vpack.c.bf16 %v1367, %v1366
          %v1431 = vpack.c.bf16 %v1369, %v1368
          %v1432 = vpack.c.bf16 %v1371, %v1370
          %v1433 = vpack.c.bf16 %v1373, %v1372
          %v1434 = vpack.c.bf16 %v1375, %v1374
          %v1435 = vpack.c.bf16 %v1377, %v1376
          %v1436 = vpack.c.bf16 %v1379, %v1378
          %v1437 = vpack.c.bf16 %v1381, %v1380
          %v1438 = vpack.c.bf16 %v1383, %v1382
          %v1439 = vpack.c.bf16 %v1385, %v1384
          %v1440 = vpack.c.bf16 %v1387, %v1386
          %v1441 = vpack.c.bf16 %v1389, %v1388
          %v1442 = vpack.c.bf16 %v1391, %v1390
          %v1443 = vpack.c.bf16 %v1393, %v1392
          %v1444 = vpack.c.bf16 %v1395, %v1394
          %v1445 = vpack.c.bf16 %v1397, %v1396
          %v1446 = vpack.c.bf16 %v1399, %v1398
          %v1447 = vpack.c.bf16 %v1401, %v1400
          %v1448 = vpack.c.bf16 %v1403, %v1402
          %v1449 = vpack.c.bf16 %v1405, %v1404
          %v1450 = vpack.c.bf16 %v1407, %v1406
          %v1451 = vpack.c.bf16 %v1409, %v1408
          %v1452 = vpack.c.bf16 %v1411, %v1410
          %v1453 = vpack.c.bf16 %v1413, %v1412
          %v1454 = vpack.c.bf16 %v1415, %v1414
          %v1455 = vpack.c.bf16 %v1417, %v1416
          %v1456 = vpack.c.bf16 %v1419, %v1418
          %v1457 = vpack.c.bf16 %v1421, %v1420
          %v1458 = vpack.c.bf16 %v1423, %v1422
          %v1459 = vpack.c.bf16 %v1425, %v1424
          %v1460 = vpack.c.bf16 %v1427, %v1426
          %v1461 = vpack.c.bf16 %v1429, %v1428
          %v1494 = vunpack.c.l.b16 %v1430
          %v1495 = vunpack.c.h.b16 %v1430
          %v1496 = vunpack.c.l.b16 %v1431
          %v1497 = vunpack.c.h.b16 %v1431
          %v1498 = vunpack.c.l.b16 %v1432
          %v1499 = vunpack.c.h.b16 %v1432
          %v1500 = vunpack.c.l.b16 %v1433
          %v1501 = vunpack.c.h.b16 %v1433
          %v1502 = vunpack.c.l.b16 %v1434
          %v1503 = vunpack.c.h.b16 %v1434
          %v1504 = vunpack.c.l.b16 %v1435
          %v1505 = vunpack.c.h.b16 %v1435
          %v1506 = vunpack.c.l.b16 %v1436
          %v1507 = vunpack.c.h.b16 %v1436
          %v1508 = vunpack.c.l.b16 %v1437
          %v1509 = vunpack.c.h.b16 %v1437
          %v1510 = vunpack.c.l.b16 %v1438
          %v1511 = vunpack.c.h.b16 %v1438
          %v1512 = vunpack.c.l.b16 %v1439
          %v1513 = vunpack.c.h.b16 %v1439
          %v1514 = vunpack.c.l.b16 %v1440
          %v1515 = vunpack.c.h.b16 %v1440
          %v1516 = vunpack.c.l.b16 %v1441
          %v1517 = vunpack.c.h.b16 %v1441
          %v1518 = vunpack.c.l.b16 %v1442
          %v1519 = vunpack.c.h.b16 %v1442
          %v1520 = vunpack.c.l.b16 %v1443
          %v1521 = vunpack.c.h.b16 %v1443
          %v1522 = vunpack.c.l.b16 %v1444
          %v1523 = vunpack.c.h.b16 %v1444
          %v1524 = vunpack.c.l.b16 %v1445
          %v1525 = vunpack.c.h.b16 %v1445
          %v1526 = vunpack.c.l.b16 %v1446
          %v1527 = vunpack.c.h.b16 %v1446
          %v1528 = vunpack.c.l.b16 %v1447
          %v1529 = vunpack.c.h.b16 %v1447
          %v1530 = vunpack.c.l.b16 %v1448
          %v1531 = vunpack.c.h.b16 %v1448
          %v1532 = vunpack.c.l.b16 %v1449
          %v1533 = vunpack.c.h.b16 %v1449
          %v1534 = vunpack.c.l.b16 %v1450
          %v1535 = vunpack.c.h.b16 %v1450
          %v1536 = vunpack.c.l.b16 %v1451
          %v1537 = vunpack.c.h.b16 %v1451
          %v1538 = vunpack.c.l.b16 %v1452
          %v1539 = vunpack.c.h.b16 %v1452
          %v1540 = vunpack.c.l.b16 %v1453
          %v1541 = vunpack.c.h.b16 %v1453
          %v1542 = vunpack.c.l.b16 %v1454
          %v1543 = vunpack.c.h.b16 %v1454
          %v1544 = vunpack.c.l.b16 %v1455
          %v1545 = vunpack.c.h.b16 %v1455
          %v1546 = vunpack.c.l.b16 %v1456
          %v1547 = vunpack.c.h.b16 %v1456
          %v1548 = vunpack.c.l.b16 %v1457
          %v1549 = vunpack.c.h.b16 %v1457
          %v1550 = vunpack.c.l.b16 %v1458
          %v1551 = vunpack.c.h.b16 %v1458
          %v1552 = vunpack.c.l.b16 %v1459
          %v1553 = vunpack.c.h.b16 %v1459
          %v1554 = vunpack.c.l.b16 %v1460
          %v1555 = vunpack.c.h.b16 %v1460
          %v1556 = vunpack.c.l.b16 %v1461
          %v1557 = vunpack.c.h.b16 %v1461
          %v1558 = vpack.c.b16 %v1494, %v1494
          %v1559 = vpack.c.b16 %v1495, %v1495
          %v1560 = vpack.c.b16 %v1496, %v1496
          %v1561 = vpack.c.b16 %v1497, %v1497
          %v1562 = vpack.c.b16 %v1498, %v1498
          %v1563 = vpack.c.b16 %v1499, %v1499
          %v1564 = vpack.c.b16 %v1500, %v1500
          %v1565 = vpack.c.b16 %v1501, %v1501
          %v1566 = vpack.c.b16 %v1502, %v1502
          %v1567 = vpack.c.b16 %v1503, %v1503
          %v1568 = vpack.c.b16 %v1504, %v1504
          %v1569 = vpack.c.b16 %v1505, %v1505
          %v1570 = vpack.c.b16 %v1506, %v1506
          %v1571 = vpack.c.b16 %v1507, %v1507
          %v1572 = vpack.c.b16 %v1508, %v1508
          %v1573 = vpack.c.b16 %v1509, %v1509
          %v1574 = vpack.c.b16 %v1510, %v1510
          %v1575 = vpack.c.b16 %v1511, %v1511
          %v1576 = vpack.c.b16 %v1512, %v1512
          %v1577 = vpack.c.b16 %v1513, %v1513
          %v1578 = vpack.c.b16 %v1514, %v1514
          %v1579 = vpack.c.b16 %v1515, %v1515
          %v1580 = vpack.c.b16 %v1516, %v1516
          %v1581 = vpack.c.b16 %v1517, %v1517
          %v1582 = vpack.c.b16 %v1518, %v1518
          %v1583 = vpack.c.b16 %v1519, %v1519
          %v1584 = vpack.c.b16 %v1520, %v1520
          %v1585 = vpack.c.b16 %v1521, %v1521
          %v1586 = vpack.c.b16 %v1522, %v1522
          %v1587 = vpack.c.b16 %v1523, %v1523
          %v1588 = vpack.c.b16 %v1524, %v1524
          %v1589 = vpack.c.b16 %v1525, %v1525
          %v1590 = vpack.c.b16 %v1526, %v1526
          %v1591 = vpack.c.b16 %v1527, %v1527
          %v1592 = vpack.c.b16 %v1528, %v1528
          %v1593 = vpack.c.b16 %v1529, %v1529
          %v1594 = vpack.c.b16 %v1530, %v1530
          %v1595 = vpack.c.b16 %v1531, %v1531
          %v1596 = vpack.c.b16 %v1532, %v1532
          %v1597 = vpack.c.b16 %v1533, %v1533
          %v1598 = vpack.c.b16 %v1534, %v1534
          %v1599 = vpack.c.b16 %v1535, %v1535
          %v1600 = vpack.c.b16 %v1536, %v1536
          %v1601 = vpack.c.b16 %v1537, %v1537
          %v1602 = vpack.c.b16 %v1538, %v1538
          %v1603 = vpack.c.b16 %v1539, %v1539
          %v1604 = vpack.c.b16 %v1540, %v1540
          %v1605 = vpack.c.b16 %v1541, %v1541
          %v1606 = vpack.c.b16 %v1542, %v1542
          %v1607 = vpack.c.b16 %v1543, %v1543
          %v1608 = vpack.c.b16 %v1544, %v1544
          %v1609 = vpack.c.b16 %v1545, %v1545
          %v1610 = vpack.c.b16 %v1546, %v1546
          %v1611 = vpack.c.b16 %v1547, %v1547
          %v1612 = vpack.c.b16 %v1548, %v1548
          %v1613 = vpack.c.b16 %v1549, %v1549
          %v1614 = vpack.c.b16 %v1550, %v1550
          %v1615 = vpack.c.b16 %v1551, %v1551
          %v1616 = vpack.c.b16 %v1552, %v1552
          %v1617 = vpack.c.b16 %v1553, %v1553
          %v1618 = vpack.c.b16 %v1554, %v1554
          %v1619 = vpack.c.b16 %v1555, %v1555
          %v1620 = vpack.c.b16 %v1556, %v1556
          %v1621 = vpack.c.b16 %v1557, %v1557
          %1686 = vst [vmem:[%s226] sm:$0xf] %v1558
          %1687 = vst [vmem:[%s226 + $0x4] sm:$0xf] %v1559
          %1688 = vst [vmem:[%s226 + $0x8] sm:$0xf] %v1560
          %1689 = vst [vmem:[%s226 + $0xc] sm:$0xf] %v1561
          %1690 = vst [vmem:[%s226 + $0x10] sm:$0xf] %v1562
          %1691 = vst [vmem:[%s226 + $0x14] sm:$0xf] %v1563
          %1692 = vst [vmem:[%s226 + $0x18] sm:$0xf] %v1564
          %1693 = vst [vmem:[%s226 + $0x1c] sm:$0xf] %v1565
          %1694 = vst [vmem:[%s226 + $0x20] sm:$0xf] %v1566
          %1695 = vst [vmem:[%s226 + $0x24] sm:$0xf] %v1567
          %1696 = vst [vmem:[%s226 + $0x28] sm:$0xf] %v1568
          %1697 = vst [vmem:[%s226 + $0x2c] sm:$0xf] %v1569
          %1698 = vst [vmem:[%s226 + $0x30] sm:$0xf] %v1570
          %1699 = vst [vmem:[%s226 + $0x34] sm:$0xf] %v1571
          %1700 = vst [vmem:[%s226 + $0x38] sm:$0xf] %v1572
          %1701 = vst [vmem:[%s226 + $0x3c] sm:$0xf] %v1573
          %1702 = vst [vmem:[%s226 + $0x40] sm:$0xf] %v1574
          %1703 = vst [vmem:[%s226 + $0x44] sm:$0xf] %v1575
          %1704 = vst [vmem:[%s226 + $0x48] sm:$0xf] %v1576
          %1705 = vst [vmem:[%s226 + $0x4c] sm:$0xf] %v1577
          %1706 = vst [vmem:[%s226 + $0x50] sm:$0xf] %v1578
          %1707 = vst [vmem:[%s226 + $0x54] sm:$0xf] %v1579
          %1708 = vst [vmem:[%s226 + $0x58] sm:$0xf] %v1580
          %1709 = vst [vmem:[%s226 + $0x5c] sm:$0xf] %v1581
          %1710 = vst [vmem:[%s226 + $0x60] sm:$0xf] %v1582
          %1711 = vst [vmem:[%s226 + $0x64] sm:$0xf] %v1583
          %1712 = vst [vmem:[%s226 + $0x68] sm:$0xf] %v1584
          %1713 = vst [vmem:[%s226 + $0x6c] sm:$0xf] %v1585
          %1714 = vst [vmem:[%s226 + $0x70] sm:$0xf] %v1586
          %1715 = vst [vmem:[%s226 + $0x74] sm:$0xf] %v1587
          %1716 = vst [vmem:[%s226 + $0x78] sm:$0xf] %v1588
          %1717 = vst [vmem:[%s226 + $0x7c] sm:$0xf] %v1589
          %1718 = vst [vmem:[%s226 + $0x80] sm:$0xf] %v1590
          %1719 = vst [vmem:[%s226 + $0x84] sm:$0xf] %v1591
          %1720 = vst [vmem:[%s226 + $0x88] sm:$0xf] %v1592
          %1721 = vst [vmem:[%s226 + $0x8c] sm:$0xf] %v1593
          %1722 = vst [vmem:[%s226 + $0x90] sm:$0xf] %v1594
          %1723 = vst [vmem:[%s226 + $0x94] sm:$0xf] %v1595
          %1724 = vst [vmem:[%s226 + $0x98] sm:$0xf] %v1596
          %1725 = vst [vmem:[%s226 + $0x9c] sm:$0xf] %v1597
          %1726 = vst [vmem:[%s226 + $0xa0] sm:$0xf] %v1598
          %1727 = vst [vmem:[%s226 + $0xa4] sm:$0xf] %v1599
          %1728 = vst [vmem:[%s226 + $0xa8] sm:$0xf] %v1600
          %1729 = vst [vmem:[%s226 + $0xac] sm:$0xf] %v1601
          %1730 = vst [vmem:[%s226 + $0xb0] sm:$0xf] %v1602
          %1731 = vst [vmem:[%s226 + $0xb4] sm:$0xf] %v1603
          %1732 = vst [vmem:[%s226 + $0xb8] sm:$0xf] %v1604
          %1733 = vst [vmem:[%s226 + $0xbc] sm:$0xf] %v1605
          %1734 = vst [vmem:[%s226 + $0xc0] sm:$0xf] %v1606
          %1735 = vst [vmem:[%s226 + $0xc4] sm:$0xf] %v1607
          %1736 = vst [vmem:[%s226 + $0xc8] sm:$0xf] %v1608
          %1737 = vst [vmem:[%s226 + $0xcc] sm:$0xf] %v1609
          %1738 = vst [vmem:[%s226 + $0xd0] sm:$0xf] %v1610
          %1739 = vst [vmem:[%s226 + $0xd4] sm:$0xf] %v1611
          %1740 = vst [vmem:[%s226 + $0xd8] sm:$0xf] %v1612
          %1741 = vst [vmem:[%s226 + $0xdc] sm:$0xf] %v1613
          %1742 = vst [vmem:[%s226 + $0xe0] sm:$0xf] %v1614
          %1743 = vst [vmem:[%s226 + $0xe4] sm:$0xf] %v1615
          %1744 = vst [vmem:[%s226 + $0xe8] sm:$0xf] %v1616
          %1745 = vst [vmem:[%s226 + $0xec] sm:$0xf] %v1617
          %1746 = vst [vmem:[%s226 + $0xf0] sm:$0xf] %v1618
          %1747 = vst [vmem:[%s226 + $0xf4] sm:$0xf] %v1619
          %1748 = vst [vmem:[%s226 + $0xf8] sm:$0xf] %v1620
          %1749 = vst [vmem:[%s226 + $0xfc] sm:$0xf] %v1621
        $region48: #{tpu_custom_call.1} parent=31 // pred_fallthru
          _
        %s1750 = sand.u32 %s116, 1
        %s1751 = scalar_lea.sflag [#allocation5], %s1750
        %s1752 = sand.u32 %s116, 1
        %s1753 = smul.addr %s1752, 256
        %s1754 = scalar_lea.vmem [#allocation8], %s1753
        // Predicated region
        $region49: #{tpu_custom_call.1} parent=31 // pred_check
          %p1755 = pneg %p126
        $region50: #{tpu_custom_call.1} parent=31 // pred_check_branch
          %1757 = sbr.rel (%p1755) target = $region52
        $region51: #{tpu_custom_call.1} parent=31 // pred_region
          %s1758 = smul.u32 64, %s25
          %s1760 = ssub.s32 4096, 4096
          %1761 = vsyncadd %s1751, %s1760
          %s1762 = smul.addr %s1758, 64
          %s1763 = scalar_lea.hbm %s3, %s1762
          %s1764 = sshll.u32 %s1754, 4
          %s1765 = int_to_ptr.vmem [resolvable:$true] %s1764
          %1770 = dma.vmem_to_hbm [thread:$0]  %s1765, 4096, %s1763, %s1751, 64, 64, 4
        $region52: #{tpu_custom_call.1} parent=31 // pred_fallthru
          _
      $region32: #{tpu_custom_call.1} parent=5 // pred_fallthru
        _
      %p1771 = scmp.le.s32.totalorder 2, %s16
      // Predicated region
      $region53: #{tpu_custom_call.1} parent=5 // pred_check
        %p1772 = pneg %p1771
      $region54: #{tpu_custom_call.1} parent=5 // pred_check_branch
        %1774 = sbr.rel (%p1772) target = $region56
      $region55: #{tpu_custom_call.1} parent=5 // pred_region
        %s1775 = ssub.s32 %s16, 2
        // Predicated region
        $region57: #{tpu_custom_call.1} parent=55 // pred_check
          %p1776 = pneg %p132
        $region58: #{tpu_custom_call.1} parent=55 // pred_check_branch
          %1778 = sbr.rel (%p1776) target = $region60
        $region59: #{tpu_custom_call.1} parent=55 // pred_region
          %s1779 = sand.u32 %s117, 1
          %s1780 = scalar_lea.sflag [#allocation5], %s1779
          %s1781 = sand.u32 %s117, 1
          %s1782 = smul.addr %s1781, 256
          %s1783 = scalar_lea.vmem [#allocation8], %s1782
          %1784 = dma.done %s1780, 4096
        $region60: #{tpu_custom_call.1} parent=55 // pred_fallthru
          _
      $region56: #{tpu_custom_call.1} parent=5 // pred_fallthru
        _
    $region6: #{tpu_custom_call.1} parent=1 // loop_footer
      %s20 = sadd.s32 1, %s16
    $region7: #{tpu_custom_call.1} parent=1 // loop_footer_branch
      %15 = sbr.rel target = $region3
    $region8: #{tpu_custom_call.1} parent=1 // loop_exit
      _
    %1785 = vsyncpa [#allocation4], 1
    %s1786 = scalar_lea.sflag [#allocation4], 1
    %1787 = vsyncpa %s1786, 1
    %1788 = vsyncpa [#allocation7], 1
    %1789 = vsyncpa [#allocation5], 1
    %s1790 = scalar_lea.sflag [#allocation5], 1
    %1791 = vsyncpa %s1790, 1

</llo_original>
